<compile_context>
chip_gen: v5e
topology: v5e:2x2
jax: 0.10.0
libtpu: 0.0.40
codegen_flags: <defaults>
</compile_context>

<pallas_src>
import math
import jax
import jax.numpy as jnp
from jax import lax
from jax.experimental import pallas as pl
from jax.experimental.pallas import tpu as pltpu


def _round_up(v, mult):
    return ((v + mult - 1) // mult) * mult


def _softplus(x):
    # torch.nn.Softplus(beta=1), numerically stable form (log1p/exp -> EUP)
    return jnp.maximum(x, 0.0) + jnp.log1p(jnp.exp(-jnp.abs(x)))


def _make_block_kernel(reg_exp, nx, off_t1, off_d1, off_a1, n_bisect=4, n_newton=3):
    f32 = jnp.float32
    eps = 1e-30

    def kernel(scal_ref,                       # SMEM (3,): lin3_b, soft(gamma), soft(d)
               x_ref, xb_ref,                  # (TB, m_pad) blocks (channel dim squeezed)
               wx_ref, pelttp_ref, peigt_ref,
               b1_ref, a2_ref, b2f_ref, w3_ref,
               hsq_ref, tsq_ref, eneg2a_ref, e2p_ref,
               out_ref):
        x = x_ref[...]                         # (TB, m_pad)
        xb = xb_ref[...]                       # (TB, m_pad)

        lin3_b = scal_ref[0]
        soft_gamma = scal_ref[1]               # Softplus(Block.gamma)
        soft_d = scal_ref[2]                   # Softplus(Cnn_reg.d)

        # ------------- one wide MXU pass: x @ [Pelt^T | tTT^T Pelt^T | tDD^T Pelt^T | A1]
        wx = wx_ref[...]
        xw = jnp.dot(x.astype(wx.dtype), wx, preferred_element_type=f32)    # (TB, wx_cols)
        w_pelt = pelttp_ref[...]
        xbp = jnp.dot(xb.astype(w_pelt.dtype), w_pelt,
                      preferred_element_type=f32)                           # xb @ Pelt^T

        # 128-aligned lane slices of the wide result (no relayout)
        xP = xw[:, 0:nx]                          # x @ Pelt^T
        xT1 = xw[:, off_t1:off_t1 + nx]           # (x @ tTT^T) @ Pelt^T
        xD1 = xw[:, off_d1:off_d1 + nx]           # (x @ tDD^T) @ Pelt^T
        xA1 = xw[:, off_a1:off_a1 + 64]           # Cnn_bar folded first stage

        # ---------------- mu = Cnn_bar(Pelt(x)) ----------------
        h = _softplus(xA1 + b1_ref[...])
        h = _softplus(jnp.dot(h, a2_ref[...], preferred_element_type=f32) + b2f_ref[...])
        mu = _softplus(jnp.sum(h * w3_ref[...], axis=1, keepdims=True) + lin3_b)   # (TB,1)

        # ---------------- reg = Cnn_reg(x_b) ----------------
        # head/tail filter masks and eig^{2a} are folded and squared offline, so
        # reg = soft(d) * (||tail||/||head||)^reg_exp  is computed from sums of squares.
        xb2 = xb * xb
        ss_head = jnp.sum(xb2 * hsq_ref[...], axis=1, keepdims=True)        # (TB,1)
        ss_tail = jnp.sum(xb2 * tsq_ref[...], axis=1, keepdims=True)
        reg = soft_d * jnp.exp((0.5 * reg_exp) *
                               (jnp.log(ss_tail + eps) - jnp.log(ss_head + eps)))

        # ---------------- step size gamma ----------------
        # padded lanes of eneg2a are -1e30 (never selected by the max)
        denom = jnp.max(eneg2a_ref[...] + reg * e2p_ref[...], axis=1, keepdims=True)
        gamma = soft_gamma / denom               # exact divide: feeds the whole prox step

        # ---------------- gradient step, already expressed in the Pelt basis ----------------
        # u = Pelt(x - gamma*(tTT x - xb + reg * tDD x))
        u = xP - gamma * (xT1 - xbp + reg * xD1)                            # (TB, nx)

        # ---------------- cardan (cube constraint) ----------------
        # prox of the log-barrier of [0,1]: unique root in (0,1) of
        #   (p - u) p (1 - p) = gm (1 - 2p),   gm = gamma*mu/1e6
        # TODO(synk): FBRN's closed-form Cardano root selection (myfunc.cardan) was not
        # provided; the same root is located by 4 bracketing bisections + 3 safeguarded
        # Newton steps (quadratic convergence from a 2^-4 bracket).
        gm = gamma * mu * 1e-6                                              # (TB,1)

        def cubic(p_):
            return (p_ - u) * p_ * (1.0 - p_) - gm * (1.0 - 2.0 * p_)

        def bis(_, carry):
            lo, hi = carry
            mid = 0.5 * (lo + hi)
            neg = cubic(mid) < 0.0
            return jnp.where(neg, mid, lo), jnp.where(neg, hi, mid)

        lo, hi = lax.fori_loop(0, n_bisect, bis,
                               (jnp.zeros_like(u), jnp.ones_like(u)),
                               unroll=True)

        def newton(_, p_):
            f = cubic(p_)
            df = -3.0 * p_ * p_ + 2.0 * (1.0 + u) * p_ - u + 2.0 * gm
            df = jnp.where(jnp.abs(df) > 1e-12, df, 1e-12)
            p_n = p_ - f * pl.reciprocal(df, approx=True)
            return jnp.clip(p_n, lo, hi)         # safeguard: stay inside bisection bracket

        p_root = lax.fori_loop(0, n_newton, newton, 0.5 * (lo + hi), unroll=True)

        # ---------------- Peig: back to the eigen basis (lane-dense store) ----------------
        w_peig = peigt_ref[...]
        out_ref[...] = jnp.dot(p_root.astype(w_peig.dtype), w_peig,
                               preferred_element_type=f32).astype(out_ref.dtype)

    return kernel


# ----------------------- plain-JAX parameter glue -----------------------

def _conv_toeplitz(w, L):
    """(L, L) matrix T with x @ T == Conv1d(1,1,5,padding=2)(x) (no bias)."""
    T = jnp.zeros((L, L), jnp.float32)
    for k in range(5):
        T = T + w[k] * jnp.eye(L, k=2 - k, dtype=jnp.float32)
    return T


def _avgpool_matrix(L):
    """(L, L//4) matrix P with x @ P == AvgPool1d(4, 4)(x)."""
    return jnp.repeat(jnp.eye(L // 4, dtype=jnp.float32), 4, axis=0) * 0.25


def prepare_block_params(raw, weights_dtype=jnp.float32):
    """Fold all linear chains offline and build kernel-ready, lane-padded operands.

    weights_dtype: dtype of the three streamed matrices (Wx, Pelt^T, Peig^T);
    jnp.bfloat16 halves their HBM/VMEM traffic on v5e/v6e (validate accuracy first).
    """
    f32 = jnp.float32
    eigv = jnp.asarray(raw["eigv"], f32)            # (m,)
    m = int(eigv.shape[0])
    Pelt = jnp.asarray(raw["Pelt"], f32)            # (nx, m)
    Peig = jnp.asarray(raw["Peig"], f32)            # (m, nx)
    tTT = jnp.asarray(raw["tTT"], f32)              # (m, m)
    tDD = jnp.asarray(raw["tDD"], f32)              # (m, m)
    nx = int(Pelt.shape[0])
    a, p = float(raw["a"]), float(raw["p"])
    m_pad = _round_up(m, 128)
    dm = m_pad - m

    # MyMatmul(K): y = x @ K.T  ->  every operator is pre-transposed
    peltt = Pelt.T                                   # (m, nx)
    peigt = Peig.T                                   # (nx, m)
    # fold tTT/tDD through Pelt: x@T1 == (x@tTT^T)@Pelt^T  (gamma/reg are per-row scalars)
    T1 = tTT.T @ peltt                               # (m, nx)
    D1 = tDD.T @ peltt                               # (m, nx)

    # fold Cnn_bar linear chains offline (Pelt->lin2->conv2->avgpool4) and (conv3->avgpool4)
    C2 = _conv_toeplitz(jnp.asarray(raw["conv2_w"], f32), 256)
    P256 = _avgpool_matrix(256)
    C3 = _conv_toeplitz(jnp.asarray(raw["conv3_w"], f32), 64)
    P64 = _avgpool_matrix(64)
    W2t = jnp.asarray(raw["lin2_w"], f32).T          # (nx, 256)
    b2 = jnp.asarray(raw["lin2_b"], f32).reshape(1, 256)
    A1 = peltt @ (W2t @ (C2 @ P256))                 # (m, 64)
    b1 = (b2 @ C2 + float(raw["conv2_b"])) @ P256    # (1, 64)
    A2 = C3 @ P64                                    # (64, 16)
    b2f = (float(raw["conv3_b"]) * jnp.ones((1, 64), f32)) @ P64   # (1, 16)
    w3 = jnp.asarray(raw["lin3_w"], f32).reshape(1, 16)

    # concatenate all x-side right operands into ONE wide matrix, 128-aligned column blocks
    nx_blk = _round_up(nx, 128)
    off_t1, off_d1, off_a1 = nx_blk, 2 * nx_blk, 3 * nx_blk
    wx_cols = off_a1 + _round_up(64, 128)
    Wx = jnp.zeros((m_pad, wx_cols), f32)
    Wx = Wx.at[:m, 0:nx].set(peltt)
    Wx = Wx.at[:m, off_t1:off_t1 + nx].set(T1)
    Wx = Wx.at[:m, off_d1:off_d1 + nx].set(D1)
    Wx = Wx.at[:m, off_a1:off_a1 + 64].set(A1)

    pelttp = jnp.zeros((m_pad, nx), f32).at[:m, :].set(peltt)
    peigtp = jnp.zeros((nx, m_pad), f32).at[:, :m].set(peigt)

    # eigenvalue rows; head/tail filter masks folded in and pre-squared
    nflt = 4 * m // 5
    head = (jnp.arange(m) < nflt).astype(f32)
    eig2a = eigv ** (2.0 * a)
    e2a_head_sq = ((eig2a * head) ** 2).reshape(1, m)
    e2a_tail_sq = ((eig2a * (1.0 - head)) ** 2).reshape(1, m)
    eneg2a = (eigv ** (-2.0 * a)).reshape(1, m)
    e2p = (eigv ** (2.0 * p)).reshape(1, m)

    pad_cols = lambda v, val=0.0: jnp.pad(v, ((0, 0), (0, dm)), constant_values=val)

    soft_gamma = math.log1p(math.exp(float(raw["gamma"])))
    soft_d = math.log1p(math.exp(float(raw["d"])))

    return dict(
        m=m, nx=nx, m_pad=m_pad,
        reg_exp=float(2.0 * (a + p) / (a + 2.0)),
        off_t1=off_t1, off_d1=off_d1, off_a1=off_a1,
        wx=Wx.astype(weights_dtype),                 # (m_pad, wx_cols)
        pelttp=pelttp.astype(weights_dtype),         # (m_pad, nx)
        peigt=peigtp.astype(weights_dtype),          # (nx, m_pad)
        b1=b1, a2=A2, b2f=b2f, w3=w3,
        e2a_head_sq=pad_cols(e2a_head_sq),
        e2a_tail_sq=pad_cols(e2a_tail_sq),
        eneg2a=pad_cols(eneg2a, -1e30),              # padded lanes never win the amax
        e2p=pad_cols(e2p),
        scal=jnp.array([float(raw["lin3_b"]), soft_gamma, soft_d], f32),
    )


# ----------------------- wrappers -----------------------

def default_tb(n):
    """Batch rows per grid step: <=512 (128 on v5*), and >=2 grid steps whenever n > 8
    so 'parallel' semantics can shard the batch over v7x's two TensorCores."""
    cap = 512
    try:
        if "v5" in jax.devices()[0].device_kind.lower():
            cap = 128
    except Exception:
        pass
    return int(min(cap, max(8, _round_up(-(-n // 2), 8))))


def pad_signals(x, prep, tb):
    """(n, 1, m) -> batch/lane padded (n_pad, 1, m_pad) f32. Pad once per network."""
    n, c, m = x.shape
    n_pad = _round_up(n, tb)
    return jnp.pad(x.astype(jnp.float32),
                   ((0, n_pad - n), (0, 0), (0, prep["m_pad"] - m)))


def _weight_list(prep):
    return [prep["wx"], prep["pelttp"], prep["peigt"],
            prep["b1"], prep["a2"], prep["b2f"], prep["w3"],
            prep["e2a_head_sq"], prep["e2a_tail_sq"], prep["eneg2a"], prep["e2p"]]


def block_forward_padded(xp, xbp, prep, *, tb):
    """Runs on already padded (n_pad, 1, m_pad) signals; returns the same padded layout.
    Use this per-Block in a multi-block network to avoid pad/slice HBM round trips."""
    n_pad, c, m_pad = xp.shape
    assert c == 1 and m_pad == prep["m_pad"] and n_pad % tb == 0

    weights = _weight_list(prep)
    sig_spec = pl.BlockSpec((tb, None, m_pad), lambda i: (i, 0, 0))
    # constant weights: index_map is always (0, 0) so they are fetched once and stay resident
    wt_spec = lambda arr: pl.BlockSpec(arr.shape, lambda i: (0, 0))

    in_specs = ([pl.BlockSpec(memory_space=pltpu.MemorySpace.SMEM), sig_spec, sig_spec]
                + [wt_spec(w) for w in weights])

    kernel = _make_block_kernel(prep["reg_exp"], prep["nx"],
                                prep["off_t1"], prep["off_d1"], prep["off_a1"])

    # explicit scoped-VMEM budget: double-buffered signal/output blocks + weights + margin
    blk_bytes = 3 * tb * m_pad * 4
    wt_bytes = sum(int(w.size) * w.dtype.itemsize for w in weights)
    vmem_limit = int(min(64 << 20, max(16 << 20, 2 * (blk_bytes + wt_bytes) + (4 << 20))))

    return pl.pallas_call(
        kernel,
        out_shape=jax.ShapeDtypeStruct((n_pad, 1, m_pad), jnp.float32),
        grid=(n_pad // tb,),
        in_specs=in_specs,
        out_specs=pl.BlockSpec((tb, None, m_pad), lambda i: (i, 0, 0)),
        compiler_params=pltpu.CompilerParams(
            dimension_semantics=("parallel",),       # batch axis independent -> 2 TCs on v7x
            vmem_limit_bytes=vmem_limit),
    )(prep["scal"], xp, xbp, *weights)


def block_forward(x, x_b, prep, *, tb=None):
    """Pallas version of Block.forward (noisy=True, constr='cube'), single-call convenience."""
    n, c, m = x.shape
    assert c == 1, "Conv1d(1,1,...) in Cnn_bar forces channel dim == 1"
    assert m == prep["m"]
    if tb is None:
        tb = default_tb(n)
    out = block_forward_padded(pad_signals(x, prep, tb), pad_signals(x_b, prep, tb),
                               prep, tb=tb)
    return out[:n, :, :m]


if __name__ == "__main__":
    n, c, m, nx = 16, 1, 20, 32          # batch, channel, eigen-basis size, element-basis size
    a_phys, p_phys = 0.5, 1.0            # exp.a, exp.p

    key = jax.random.PRNGKey(0)
    (kx, kxb, kpelt, kpeig, ktdd, kttt,
     kw2, kb2, kc2w, kc2b, kc3w, kc3b, kw3, kb3) = jax.random.split(key, 14)
    f32 = jnp.float32

    # --- synthetic deterministic "physics" (exp.eigm, exp.Operators()) ---
    eigv = 1.0 / jnp.arange(1, m + 1, dtype=f32)                        # positive, decaying eigenvalues
    A = jax.random.normal(ktdd, (m, m), f32) / m
    tDD_K = A @ A.T                                                     # exp.Operators()[0]
    B = jax.random.normal(kttt, (m, m), f32) / m
    tTT_K = B @ B.T + jnp.diag(eigv ** 2)                               # exp.Operators()[1]
    Peig_K = jax.random.normal(kpeig, (m, nx), f32) / jnp.sqrt(nx)      # exp.Operators()[2]
    Pelt_K = jax.random.normal(kpelt, (nx, m), f32) / jnp.sqrt(m)       # exp.Operators()[3]

    # --- Cnn_bar parameters ---
    W2 = jax.random.normal(kw2, (256, nx), f32) / jnp.sqrt(nx)          # lin2.weight
    b2 = 0.1 * jax.random.normal(kb2, (256,), f32)                      # lin2.bias
    conv2_w = 0.3 * jax.random.normal(kc2w, (5,), f32)
    conv2_b = 0.1 * float(jax.random.normal(kc2b, (), f32))
    conv3_w = 0.3 * jax.random.normal(kc3w, (5,), f32)
    conv3_b = 0.1 * float(jax.random.normal(kc3b, (), f32))
    W3 = jax.random.normal(kw3, (1, 16), f32) / 4.0                     # lin3.weight
    b3 = 0.1 * float(jax.random.normal(kb3, (), f32))

    raw = dict(
        a=a_phys, p=p_phys, eigv=eigv,
        Pelt=Pelt_K, Peig=Peig_K, tTT=tTT_K, tDD=tDD_K,
        lin2_w=W2, lin2_b=b2, conv2_w=conv2_w, conv2_b=conv2_b,
        conv3_w=conv3_w, conv3_b=conv3_b, lin3_w=W3, lin3_b=b3,
        gamma=0.0,                                                      # Block.gamma init
        d=0.01,                                                         # Cnn_reg.d init
    )
    prep = prepare_block_params(raw)                                    # weights_dtype=bf16 is the v5e/v6e knob

    x = 0.5 * jax.random.normal(kx, (n, c, m), f32)      # previous iterate (eigen basis)
    x_b = 0.5 * jax.random.normal(kxb, (n, c, m), f32)   # bias H^T y (eigen basis)

    out = jax.block_until_ready(block_forward(x, x_b, prep))
    assert out.shape == (n, c, m)
    assert bool(jnp.all(jnp.isfinite(out)))
    print("KERNEL_OK")
</pallas_src>

<mosaic_0001>
module attributes {stable_mosaic.version = 11 : i64} {
  func.func @kernel(%arg0: i32, %arg1: memref<3xf32, #tpu.memory_space<smem>>, %arg2: memref<8x1x128xf32, #tpu.memory_space<vmem>>, %arg3: memref<8x1x128xf32, #tpu.memory_space<vmem>>, %arg4: memref<128x512xf32, #tpu.memory_space<vmem>>, %arg5: memref<128x32xf32, #tpu.memory_space<vmem>>, %arg6: memref<32x128xf32, #tpu.memory_space<vmem>>, %arg7: memref<1x64xf32, #tpu.memory_space<vmem>>, %arg8: memref<64x16xf32, #tpu.memory_space<vmem>>, %arg9: memref<1x16xf32, #tpu.memory_space<vmem>>, %arg10: memref<1x16xf32, #tpu.memory_space<vmem>>, %arg11: memref<1x128xf32, #tpu.memory_space<vmem>>, %arg12: memref<1x128xf32, #tpu.memory_space<vmem>>, %arg13: memref<1x128xf32, #tpu.memory_space<vmem>>, %arg14: memref<1x128xf32, #tpu.memory_space<vmem>>, %arg15: memref<8x1x128xf32, #tpu.memory_space<vmem>>) attributes {dimension_semantics = [#tpu.dimension_semantics<parallel>], iteration_bounds = array<i64: 2>, scalar_prefetch = 0 : i64, scratch_operands = 0 : i64, tpu.core_type = #tpu.core_type<tc>, window_params = [{transform_indices = @transform_0, window_bounds = array<i64: 3>}, {transform_indices = @transform_1, window_bounds = array<i64: 8, 1, 128>}, {transform_indices = @transform_2, window_bounds = array<i64: 8, 1, 128>}, {pipeline_mode = #tpu.pipeline_mode<synchronous>, transform_indices = @transform_3, window_bounds = array<i64: 128, 512>}, {pipeline_mode = #tpu.pipeline_mode<synchronous>, transform_indices = @transform_4, window_bounds = array<i64: 128, 32>}, {pipeline_mode = #tpu.pipeline_mode<synchronous>, transform_indices = @transform_5, window_bounds = array<i64: 32, 128>}, {pipeline_mode = #tpu.pipeline_mode<synchronous>, transform_indices = @transform_6, window_bounds = array<i64: 1, 64>}, {pipeline_mode = #tpu.pipeline_mode<synchronous>, transform_indices = @transform_7, window_bounds = array<i64: 64, 16>}, {pipeline_mode = #tpu.pipeline_mode<synchronous>, transform_indices = @transform_8, window_bounds = array<i64: 1, 16>}, {pipeline_mode = #tpu.pipeline_mode<synchronous>, transform_indices = @transform_9, window_bounds = array<i64: 1, 16>}, {pipeline_mode = #tpu.pipeline_mode<synchronous>, transform_indices = @transform_10, window_bounds = array<i64: 1, 128>}, {pipeline_mode = #tpu.pipeline_mode<synchronous>, transform_indices = @transform_11, window_bounds = array<i64: 1, 128>}, {pipeline_mode = #tpu.pipeline_mode<synchronous>, transform_indices = @transform_12, window_bounds = array<i64: 1, 128>}, {pipeline_mode = #tpu.pipeline_mode<synchronous>, transform_indices = @transform_13, window_bounds = array<i64: 1, 128>}, {transform_indices = @transform_14, window_bounds = array<i64: 8, 1, 128>}]} {
    %c0 = arith.constant 0 : index
    %c0_0 = arith.constant 0 : index
    %c0_1 = arith.constant 0 : index
    %0 = vector.load %arg2[%c0, %c0_0, %c0_1] : memref<8x1x128xf32, #tpu.memory_space<vmem>>, vector<8x1x128xf32>
    %1 = vector.shape_cast %0 : vector<8x1x128xf32> to vector<8x128xf32>
    %c0_2 = arith.constant 0 : index
    %c0_3 = arith.constant 0 : index
    %c0_4 = arith.constant 0 : index
    %2 = vector.load %arg3[%c0_2, %c0_3, %c0_4] : memref<8x1x128xf32, #tpu.memory_space<vmem>>, vector<8x1x128xf32>
    %3 = vector.shape_cast %2 : vector<8x1x128xf32> to vector<8x128xf32>
    %c0_5 = arith.constant 0 : index
    %4 = memref.load %arg1[%c0_5] : memref<3xf32, #tpu.memory_space<smem>>
    %c1 = arith.constant 1 : index
    %5 = memref.load %arg1[%c1] : memref<3xf32, #tpu.memory_space<smem>>
    %c2 = arith.constant 2 : index
    %6 = memref.load %arg1[%c2] : memref<3xf32, #tpu.memory_space<smem>>
    %c0_6 = arith.constant 0 : index
    %c0_7 = arith.constant 0 : index
    %7 = vector.load %arg4[%c0_6, %c0_7] : memref<128x512xf32, #tpu.memory_space<vmem>>, vector<128x512xf32>
    %cst = arith.constant dense<0.000000e+00> : vector<8x512xf32>
    %8 = tpu.matmul %1, %7, %cst {dimension_numbers = #tpu.dot_dimension_numbers<[1], [0], [0], [1], [0, 0, 1, 1], [], []>} : vector<8x128xf32>, vector<128x512xf32>, vector<8x512xf32> -> vector<8x512xf32>
    %c0_8 = arith.constant 0 : index
    %c0_9 = arith.constant 0 : index
    %9 = vector.load %arg5[%c0_8, %c0_9] : memref<128x32xf32, #tpu.memory_space<vmem>>, vector<128x32xf32>
    %cst_10 = arith.constant dense<0.000000e+00> : vector<8x32xf32>
    %10 = tpu.matmul %3, %9, %cst_10 {dimension_numbers = #tpu.dot_dimension_numbers<[1], [0], [0], [1], [0, 0, 1, 1], [], []>} : vector<8x128xf32>, vector<128x32xf32>, vector<8x32xf32> -> vector<8x32xf32>
    %11 = vector.extract_strided_slice %8 {offsets = [0, 0], sizes = [8, 32], strides = [1, 1]} : vector<8x512xf32> to vector<8x32xf32>
    %12 = vector.extract_strided_slice %8 {offsets = [0, 128], sizes = [8, 32], strides = [1, 1]} : vector<8x512xf32> to vector<8x32xf32>
    %13 = vector.extract_strided_slice %8 {offsets = [0, 256], sizes = [8, 32], strides = [1, 1]} : vector<8x512xf32> to vector<8x32xf32>
    %14 = vector.extract_strided_slice %8 {offsets = [0, 384], sizes = [8, 64], strides = [1, 1]} : vector<8x512xf32> to vector<8x64xf32>
    %c0_11 = arith.constant 0 : index
    %c0_12 = arith.constant 0 : index
    %15 = vector.load %arg7[%c0_11, %c0_12] : memref<1x64xf32, #tpu.memory_space<vmem>>, vector<1x64xf32>
    %16 = vector.broadcast %15 : vector<1x64xf32> to vector<8x64xf32>
    %17 = arith.addf %14, %16 : vector<8x64xf32>
    %cst_13 = arith.constant 0.000000e+00 : f32
    %18 = vector.broadcast %cst_13 : f32 to vector<8x64xf32>
    %19 = arith.maximumf %17, %18 : vector<8x64xf32>
    %20 = math.absf %17 : vector<8x64xf32>
    %cst_14 = arith.constant 0.000000e+00 : f32
    %21 = vector.broadcast %cst_14 : f32 to vector<8x64xf32>
    %22 = arith.subf %21, %20 : vector<8x64xf32>
    %23 = math.exp %22 : vector<8x64xf32>
    %24 = math.log1p %23 : vector<8x64xf32>
    %25 = arith.addf %19, %24 : vector<8x64xf32>
    %c0_15 = arith.constant 0 : index
    %c0_16 = arith.constant 0 : index
    %26 = vector.load %arg8[%c0_15, %c0_16] : memref<64x16xf32, #tpu.memory_space<vmem>>, vector<64x16xf32>
    %cst_17 = arith.constant dense<0.000000e+00> : vector<8x16xf32>
    %27 = tpu.matmul %25, %26, %cst_17 {dimension_numbers = #tpu.dot_dimension_numbers<[1], [0], [0], [1], [0, 0, 1, 1], [], []>} : vector<8x64xf32>, vector<64x16xf32>, vector<8x16xf32> -> vector<8x16xf32>
    %c0_18 = arith.constant 0 : index
    %c0_19 = arith.constant 0 : index
    %28 = vector.load %arg9[%c0_18, %c0_19] : memref<1x16xf32, #tpu.memory_space<vmem>>, vector<1x16xf32>
    %29 = vector.broadcast %28 : vector<1x16xf32> to vector<8x16xf32>
    %30 = arith.addf %27, %29 : vector<8x16xf32>
    %cst_20 = arith.constant 0.000000e+00 : f32
    %31 = vector.broadcast %cst_20 : f32 to vector<8x16xf32>
    %32 = arith.maximumf %30, %31 : vector<8x16xf32>
    %33 = math.absf %30 : vector<8x16xf32>
    %cst_21 = arith.constant 0.000000e+00 : f32
    %34 = vector.broadcast %cst_21 : f32 to vector<8x16xf32>
    %35 = arith.subf %34, %33 : vector<8x16xf32>
    %36 = math.exp %35 : vector<8x16xf32>
    %37 = math.log1p %36 : vector<8x16xf32>
    %38 = arith.addf %32, %37 : vector<8x16xf32>
    %c0_22 = arith.constant 0 : index
    %c0_23 = arith.constant 0 : index
    %39 = vector.load %arg10[%c0_22, %c0_23] : memref<1x16xf32, #tpu.memory_space<vmem>>, vector<1x16xf32>
    %40 = vector.broadcast %39 : vector<1x16xf32> to vector<8x16xf32>
    %41 = arith.mulf %38, %40 : vector<8x16xf32>
    %cst_24 = arith.constant dense<0.000000e+00> : vector<8xf32>
    %42 = vector.multi_reduction <add>, %41, %cst_24 [1] : vector<8x16xf32> to vector<8xf32>
    %43 = vector.shape_cast %42 : vector<8xf32> to vector<8x1xf32>
    %44 = vector.broadcast %4 : f32 to vector<8x1xf32>
    %45 = arith.addf %43, %44 : vector<8x1xf32>
    %cst_25 = arith.constant 0.000000e+00 : f32
    %46 = vector.broadcast %cst_25 : f32 to vector<8x1xf32>
    %47 = arith.maximumf %45, %46 : vector<8x1xf32>
    %48 = math.absf %45 : vector<8x1xf32>
    %cst_26 = arith.constant 0.000000e+00 : f32
    %49 = vector.broadcast %cst_26 : f32 to vector<8x1xf32>
    %50 = arith.subf %49, %48 : vector<8x1xf32>
    %51 = math.exp %50 : vector<8x1xf32>
    %52 = math.log1p %51 : vector<8x1xf32>
    %53 = arith.addf %47, %52 : vector<8x1xf32>
    %54 = arith.mulf %3, %3 : vector<8x128xf32>
    %c0_27 = arith.constant 0 : index
    %c0_28 = arith.constant 0 : index
    %55 = vector.load %arg11[%c0_27, %c0_28] : memref<1x128xf32, #tpu.memory_space<vmem>>, vector<1x128xf32>
    %56 = vector.broadcast %55 : vector<1x128xf32> to vector<8x128xf32>
    %57 = arith.mulf %54, %56 : vector<8x128xf32>
    %cst_29 = arith.constant dense<0.000000e+00> : vector<8xf32>
    %58 = vector.multi_reduction <add>, %57, %cst_29 [1] : vector<8x128xf32> to vector<8xf32>
    %59 = vector.shape_cast %58 : vector<8xf32> to vector<8x1xf32>
    %c0_30 = arith.constant 0 : index
    %c0_31 = arith.constant 0 : index
    %60 = vector.load %arg12[%c0_30, %c0_31] : memref<1x128xf32, #tpu.memory_space<vmem>>, vector<1x128xf32>
    %61 = vector.broadcast %60 : vector<1x128xf32> to vector<8x128xf32>
    %62 = arith.mulf %54, %61 : vector<8x128xf32>
    %cst_32 = arith.constant dense<0.000000e+00> : vector<8xf32>
    %63 = vector.multi_reduction <add>, %62, %cst_32 [1] : vector<8x128xf32> to vector<8xf32>
    %64 = vector.shape_cast %63 : vector<8xf32> to vector<8x1xf32>
    %cst_33 = arith.constant 1.000000e-30 : f32
    %65 = vector.broadcast %cst_33 : f32 to vector<8x1xf32>
    %66 = arith.addf %64, %65 : vector<8x1xf32>
    %67 = math.log %66 : vector<8x1xf32>
    %cst_34 = arith.constant 1.000000e-30 : f32
    %68 = vector.broadcast %cst_34 : f32 to vector<8x1xf32>
    %69 = arith.addf %59, %68 : vector<8x1xf32>
    %70 = math.log %69 : vector<8x1xf32>
    %71 = arith.subf %67, %70 : vector<8x1xf32>
    %cst_35 = arith.constant 6.000000e-01 : f32
    %72 = vector.broadcast %cst_35 : f32 to vector<8x1xf32>
    %73 = arith.mulf %72, %71 : vector<8x1xf32>
    %74 = math.exp %73 : vector<8x1xf32>
    %75 = vector.broadcast %6 : f32 to vector<8x1xf32>
    %76 = arith.mulf %75, %74 : vector<8x1xf32>
    %c0_36 = arith.constant 0 : index
    %c0_37 = arith.constant 0 : index
    %77 = vector.load %arg13[%c0_36, %c0_37] : memref<1x128xf32, #tpu.memory_space<vmem>>, vector<1x128xf32>
    %c0_38 = arith.constant 0 : index
    %c0_39 = arith.constant 0 : index
    %78 = vector.load %arg14[%c0_38, %c0_39] : memref<1x128xf32, #tpu.memory_space<vmem>>, vector<1x128xf32>
    %79 = vector.broadcast %76 : vector<8x1xf32> to vector<8x128xf32>
    %80 = vector.broadcast %78 : vector<1x128xf32> to vector<8x128xf32>
    %81 = arith.mulf %79, %80 : vector<8x128xf32>
    %82 = vector.broadcast %77 : vector<1x128xf32> to vector<8x128xf32>
    %83 = arith.addf %82, %81 : vector<8x128xf32>
    %cst_40 = arith.constant dense<0xFF800000> : vector<8xf32>
    %84 = vector.multi_reduction <maximumf>, %83, %cst_40 [1] : vector<8x128xf32> to vector<8xf32>
    %85 = vector.shape_cast %84 : vector<8xf32> to vector<8x1xf32>
    %86 = vector.broadcast %5 : f32 to vector<8x1xf32>
    %87 = arith.divf %86, %85 : vector<8x1xf32>
    %88 = arith.subf %12, %10 : vector<8x32xf32>
    %89 = vector.broadcast %76 : vector<8x1xf32> to vector<8x32xf32>
    %90 = arith.mulf %89, %13 : vector<8x32xf32>
    %91 = arith.addf %88, %90 : vector<8x32xf32>
    %92 = vector.broadcast %87 : vector<8x1xf32> to vector<8x32xf32>
    %93 = arith.mulf %92, %91 : vector<8x32xf32>
    %94 = arith.subf %11, %93 : vector<8x32xf32>
    %95 = arith.mulf %87, %53 : vector<8x1xf32>
    %cst_41 = arith.constant 9.99999997E-7 : f32
    %96 = vector.broadcast %cst_41 : f32 to vector<8x1xf32>
    %97 = arith.mulf %95, %96 : vector<8x1xf32>
    %cst_42 = arith.constant 0.000000e+00 : f32
    %98 = vector.broadcast %cst_42 : f32 to vector<8x32xf32>
    %cst_43 = arith.constant 1.000000e+00 : f32
    %99 = vector.broadcast %cst_43 : f32 to vector<8x32xf32>
    %c0_i32 = arith.constant 0 : i32
    %100 = arith.addf %98, %99 : vector<8x32xf32>
    %cst_44 = arith.constant 5.000000e-01 : f32
    %101 = vector.broadcast %cst_44 : f32 to vector<8x32xf32>
    %102 = arith.mulf %101, %100 : vector<8x32xf32>
    %103 = arith.subf %102, %94 : vector<8x32xf32>
    %104 = arith.mulf %103, %102 : vector<8x32xf32>
    %cst_45 = arith.constant 1.000000e+00 : f32
    %105 = vector.broadcast %cst_45 : f32 to vector<8x32xf32>
    %106 = arith.subf %105, %102 : vector<8x32xf32>
    %107 = arith.mulf %104, %106 : vector<8x32xf32>
    %cst_46 = arith.constant 2.000000e+00 : f32
    %108 = vector.broadcast %cst_46 : f32 to vector<8x32xf32>
    %109 = arith.mulf %108, %102 : vector<8x32xf32>
    %cst_47 = arith.constant 1.000000e+00 : f32
    %110 = vector.broadcast %cst_47 : f32 to vector<8x32xf32>
    %111 = arith.subf %110, %109 : vector<8x32xf32>
    %112 = vector.broadcast %97 : vector<8x1xf32> to vector<8x32xf32>
    %113 = arith.mulf %112, %111 : vector<8x32xf32>
    %114 = arith.subf %107, %113 : vector<8x32xf32>
    %cst_48 = arith.constant 0.000000e+00 : f32
    %115 = vector.broadcast %cst_48 : f32 to vector<8x32xf32>
    %116 = arith.cmpf olt, %114, %115 : vector<8x32xf32>
    %117 = arith.select %116, %102, %98 : vector<8x32xi1>, vector<8x32xf32>
    %118 = arith.select %116, %99, %102 : vector<8x32xi1>, vector<8x32xf32>
    %c1_i32 = arith.constant 1 : i32
    %119 = arith.addf %117, %118 : vector<8x32xf32>
    %cst_49 = arith.constant 5.000000e-01 : f32
    %120 = vector.broadcast %cst_49 : f32 to vector<8x32xf32>
    %121 = arith.mulf %120, %119 : vector<8x32xf32>
    %122 = arith.subf %121, %94 : vector<8x32xf32>
    %123 = arith.mulf %122, %121 : vector<8x32xf32>
    %cst_50 = arith.constant 1.000000e+00 : f32
    %124 = vector.broadcast %cst_50 : f32 to vector<8x32xf32>
    %125 = arith.subf %124, %121 : vector<8x32xf32>
    %126 = arith.mulf %123, %125 : vector<8x32xf32>
    %cst_51 = arith.constant 2.000000e+00 : f32
    %127 = vector.broadcast %cst_51 : f32 to vector<8x32xf32>
    %128 = arith.mulf %127, %121 : vector<8x32xf32>
    %cst_52 = arith.constant 1.000000e+00 : f32
    %129 = vector.broadcast %cst_52 : f32 to vector<8x32xf32>
    %130 = arith.subf %129, %128 : vector<8x32xf32>
    %131 = vector.broadcast %97 : vector<8x1xf32> to vector<8x32xf32>
    %132 = arith.mulf %131, %130 : vector<8x32xf32>
    %133 = arith.subf %126, %132 : vector<8x32xf32>
    %cst_53 = arith.constant 0.000000e+00 : f32
    %134 = vector.broadcast %cst_53 : f32 to vector<8x32xf32>
    %135 = arith.cmpf olt, %133, %134 : vector<8x32xf32>
    %136 = arith.select %135, %121, %117 : vector<8x32xi1>, vector<8x32xf32>
    %137 = arith.select %135, %118, %121 : vector<8x32xi1>, vector<8x32xf32>
    %c2_i32 = arith.constant 2 : i32
    %138 = arith.addf %136, %137 : vector<8x32xf32>
    %cst_54 = arith.constant 5.000000e-01 : f32
    %139 = vector.broadcast %cst_54 : f32 to vector<8x32xf32>
    %140 = arith.mulf %139, %138 : vector<8x32xf32>
    %141 = arith.subf %140, %94 : vector<8x32xf32>
    %142 = arith.mulf %141, %140 : vector<8x32xf32>
    %cst_55 = arith.constant 1.000000e+00 : f32
    %143 = vector.broadcast %cst_55 : f32 to vector<8x32xf32>
    %144 = arith.subf %143, %140 : vector<8x32xf32>
    %145 = arith.mulf %142, %144 : vector<8x32xf32>
    %cst_56 = arith.constant 2.000000e+00 : f32
    %146 = vector.broadcast %cst_56 : f32 to vector<8x32xf32>
    %147 = arith.mulf %146, %140 : vector<8x32xf32>
    %cst_57 = arith.constant 1.000000e+00 : f32
    %148 = vector.broadcast %cst_57 : f32 to vector<8x32xf32>
    %149 = arith.subf %148, %147 : vector<8x32xf32>
    %150 = vector.broadcast %97 : vector<8x1xf32> to vector<8x32xf32>
    %151 = arith.mulf %150, %149 : vector<8x32xf32>
    %152 = arith.subf %145, %151 : vector<8x32xf32>
    %cst_58 = arith.constant 0.000000e+00 : f32
    %153 = vector.broadcast %cst_58 : f32 to vector<8x32xf32>
    %154 = arith.cmpf olt, %152, %153 : vector<8x32xf32>
    %155 = arith.select %154, %140, %136 : vector<8x32xi1>, vector<8x32xf32>
    %156 = arith.select %154, %137, %140 : vector<8x32xi1>, vector<8x32xf32>
    %c3_i32 = arith.constant 3 : i32
    %157 = arith.addf %155, %156 : vector<8x32xf32>
    %cst_59 = arith.constant 5.000000e-01 : f32
    %158 = vector.broadcast %cst_59 : f32 to vector<8x32xf32>
    %159 = arith.mulf %158, %157 : vector<8x32xf32>
    %160 = arith.subf %159, %94 : vector<8x32xf32>
    %161 = arith.mulf %160, %159 : vector<8x32xf32>
    %cst_60 = arith.constant 1.000000e+00 : f32
    %162 = vector.broadcast %cst_60 : f32 to vector<8x32xf32>
    %163 = arith.subf %162, %159 : vector<8x32xf32>
    %164 = arith.mulf %161, %163 : vector<8x32xf32>
    %cst_61 = arith.constant 2.000000e+00 : f32
    %165 = vector.broadcast %cst_61 : f32 to vector<8x32xf32>
    %166 = arith.mulf %165, %159 : vector<8x32xf32>
    %cst_62 = arith.constant 1.000000e+00 : f32
    %167 = vector.broadcast %cst_62 : f32 to vector<8x32xf32>
    %168 = arith.subf %167, %166 : vector<8x32xf32>
    %169 = vector.broadcast %97 : vector<8x1xf32> to vector<8x32xf32>
    %170 = arith.mulf %169, %168 : vector<8x32xf32>
    %171 = arith.subf %164, %170 : vector<8x32xf32>
    %cst_63 = arith.constant 0.000000e+00 : f32
    %172 = vector.broadcast %cst_63 : f32 to vector<8x32xf32>
    %173 = arith.cmpf olt, %171, %172 : vector<8x32xf32>
    %174 = arith.select %173, %159, %155 : vector<8x32xi1>, vector<8x32xf32>
    %175 = arith.select %173, %156, %159 : vector<8x32xi1>, vector<8x32xf32>
    %176 = arith.addf %174, %175 : vector<8x32xf32>
    %cst_64 = arith.constant 5.000000e-01 : f32
    %177 = vector.broadcast %cst_64 : f32 to vector<8x32xf32>
    %178 = arith.mulf %177, %176 : vector<8x32xf32>
    %c0_i32_65 = arith.constant 0 : i32
    %179 = arith.subf %178, %94 : vector<8x32xf32>
    %180 = arith.mulf %179, %178 : vector<8x32xf32>
    %cst_66 = arith.constant 1.000000e+00 : f32
    %181 = vector.broadcast %cst_66 : f32 to vector<8x32xf32>
    %182 = arith.subf %181, %178 : vector<8x32xf32>
    %183 = arith.mulf %180, %182 : vector<8x32xf32>
    %cst_67 = arith.constant 2.000000e+00 : f32
    %184 = vector.broadcast %cst_67 : f32 to vector<8x32xf32>
    %185 = arith.mulf %184, %178 : vector<8x32xf32>
    %cst_68 = arith.constant 1.000000e+00 : f32
    %186 = vector.broadcast %cst_68 : f32 to vector<8x32xf32>
    %187 = arith.subf %186, %185 : vector<8x32xf32>
    %188 = vector.broadcast %97 : vector<8x1xf32> to vector<8x32xf32>
    %189 = arith.mulf %188, %187 : vector<8x32xf32>
    %190 = arith.subf %183, %189 : vector<8x32xf32>
    %cst_69 = arith.constant -3.000000e+00 : f32
    %191 = vector.broadcast %cst_69 : f32 to vector<8x32xf32>
    %192 = arith.mulf %191, %178 : vector<8x32xf32>
    %193 = arith.mulf %192, %178 : vector<8x32xf32>
    %cst_70 = arith.constant 1.000000e+00 : f32
    %194 = vector.broadcast %cst_70 : f32 to vector<8x32xf32>
    %195 = arith.addf %194, %94 : vector<8x32xf32>
    %cst_71 = arith.constant 2.000000e+00 : f32
    %196 = vector.broadcast %cst_71 : f32 to vector<8x32xf32>
    %197 = arith.mulf %196, %195 : vector<8x32xf32>
    %198 = arith.mulf %197, %178 : vector<8x32xf32>
    %199 = arith.addf %193, %198 : vector<8x32xf32>
    %200 = arith.subf %199, %94 : vector<8x32xf32>
    %cst_72 = arith.constant 2.000000e+00 : f32
    %201 = vector.broadcast %cst_72 : f32 to vector<8x1xf32>
    %202 = arith.mulf %201, %97 : vector<8x1xf32>
    %203 = vector.broadcast %202 : vector<8x1xf32> to vector<8x32xf32>
    %204 = arith.addf %200, %203 : vector<8x32xf32>
    %205 = math.absf %204 : vector<8x32xf32>
    %cst_73 = arith.constant 9.99999996E-13 : f32
    %206 = vector.broadcast %cst_73 : f32 to vector<8x32xf32>
    %207 = arith.cmpf ogt, %205, %206 : vector<8x32xf32>
    %cst_74 = arith.constant 9.99999996E-13 : f32
    %208 = vector.broadcast %cst_74 : f32 to vector<8x32xf32>
    %209 = arith.select %207, %204, %208 : vector<8x32xi1>, vector<8x32xf32>
    %210 = tpu.reciprocal %209 {approx = true} : vector<8x32xf32> -> vector<8x32xf32>
    %211 = arith.mulf %190, %210 : vector<8x32xf32>
    %212 = arith.subf %178, %211 : vector<8x32xf32>
    %213 = arith.maximumf %174, %212 : vector<8x32xf32>
    %214 = arith.minimumf %175, %213 : vector<8x32xf32>
    %c1_i32_75 = arith.constant 1 : i32
    %215 = arith.subf %214, %94 : vector<8x32xf32>
    %216 = arith.mulf %215, %214 : vector<8x32xf32>
    %cst_76 = arith.constant 1.000000e+00 : f32
    %217 = vector.broadcast %cst_76 : f32 to vector<8x32xf32>
    %218 = arith.subf %217, %214 : vector<8x32xf32>
    %219 = arith.mulf %216, %218 : vector<8x32xf32>
    %cst_77 = arith.constant 2.000000e+00 : f32
    %220 = vector.broadcast %cst_77 : f32 to vector<8x32xf32>
    %221 = arith.mulf %220, %214 : vector<8x32xf32>
    %cst_78 = arith.constant 1.000000e+00 : f32
    %222 = vector.broadcast %cst_78 : f32 to vector<8x32xf32>
    %223 = arith.subf %222, %221 : vector<8x32xf32>
    %224 = vector.broadcast %97 : vector<8x1xf32> to vector<8x32xf32>
    %225 = arith.mulf %224, %223 : vector<8x32xf32>
    %226 = arith.subf %219, %225 : vector<8x32xf32>
    %cst_79 = arith.constant -3.000000e+00 : f32
    %227 = vector.broadcast %cst_79 : f32 to vector<8x32xf32>
    %228 = arith.mulf %227, %214 : vector<8x32xf32>
    %229 = arith.mulf %228, %214 : vector<8x32xf32>
    %cst_80 = arith.constant 1.000000e+00 : f32
    %230 = vector.broadcast %cst_80 : f32 to vector<8x32xf32>
    %231 = arith.addf %230, %94 : vector<8x32xf32>
    %cst_81 = arith.constant 2.000000e+00 : f32
    %232 = vector.broadcast %cst_81 : f32 to vector<8x32xf32>
    %233 = arith.mulf %232, %231 : vector<8x32xf32>
    %234 = arith.mulf %233, %214 : vector<8x32xf32>
    %235 = arith.addf %229, %234 : vector<8x32xf32>
    %236 = arith.subf %235, %94 : vector<8x32xf32>
    %cst_82 = arith.constant 2.000000e+00 : f32
    %237 = vector.broadcast %cst_82 : f32 to vector<8x1xf32>
    %238 = arith.mulf %237, %97 : vector<8x1xf32>
    %239 = vector.broadcast %238 : vector<8x1xf32> to vector<8x32xf32>
    %240 = arith.addf %236, %239 : vector<8x32xf32>
    %241 = math.absf %240 : vector<8x32xf32>
    %cst_83 = arith.constant 9.99999996E-13 : f32
    %242 = vector.broadcast %cst_83 : f32 to vector<8x32xf32>
    %243 = arith.cmpf ogt, %241, %242 : vector<8x32xf32>
    %cst_84 = arith.constant 9.99999996E-13 : f32
    %244 = vector.broadcast %cst_84 : f32 to vector<8x32xf32>
    %245 = arith.select %243, %240, %244 : vector<8x32xi1>, vector<8x32xf32>
    %246 = tpu.reciprocal %245 {approx = true} : vector<8x32xf32> -> vector<8x32xf32>
    %247 = arith.mulf %226, %246 : vector<8x32xf32>
    %248 = arith.subf %214, %247 : vector<8x32xf32>
    %249 = arith.maximumf %174, %248 : vector<8x32xf32>
    %250 = arith.minimumf %175, %249 : vector<8x32xf32>
    %c2_i32_85 = arith.constant 2 : i32
    %251 = arith.subf %250, %94 : vector<8x32xf32>
    %252 = arith.mulf %251, %250 : vector<8x32xf32>
    %cst_86 = arith.constant 1.000000e+00 : f32
    %253 = vector.broadcast %cst_86 : f32 to vector<8x32xf32>
    %254 = arith.subf %253, %250 : vector<8x32xf32>
    %255 = arith.mulf %252, %254 : vector<8x32xf32>
    %cst_87 = arith.constant 2.000000e+00 : f32
    %256 = vector.broadcast %cst_87 : f32 to vector<8x32xf32>
    %257 = arith.mulf %256, %250 : vector<8x32xf32>
    %cst_88 = arith.constant 1.000000e+00 : f32
    %258 = vector.broadcast %cst_88 : f32 to vector<8x32xf32>
    %259 = arith.subf %258, %257 : vector<8x32xf32>
    %260 = vector.broadcast %97 : vector<8x1xf32> to vector<8x32xf32>
    %261 = arith.mulf %260, %259 : vector<8x32xf32>
    %262 = arith.subf %255, %261 : vector<8x32xf32>
    %cst_89 = arith.constant -3.000000e+00 : f32
    %263 = vector.broadcast %cst_89 : f32 to vector<8x32xf32>
    %264 = arith.mulf %263, %250 : vector<8x32xf32>
    %265 = arith.mulf %264, %250 : vector<8x32xf32>
    %cst_90 = arith.constant 1.000000e+00 : f32
    %266 = vector.broadcast %cst_90 : f32 to vector<8x32xf32>
    %267 = arith.addf %266, %94 : vector<8x32xf32>
    %cst_91 = arith.constant 2.000000e+00 : f32
    %268 = vector.broadcast %cst_91 : f32 to vector<8x32xf32>
    %269 = arith.mulf %268, %267 : vector<8x32xf32>
    %270 = arith.mulf %269, %250 : vector<8x32xf32>
    %271 = arith.addf %265, %270 : vector<8x32xf32>
    %272 = arith.subf %271, %94 : vector<8x32xf32>
    %cst_92 = arith.constant 2.000000e+00 : f32
    %273 = vector.broadcast %cst_92 : f32 to vector<8x1xf32>
    %274 = arith.mulf %273, %97 : vector<8x1xf32>
    %275 = vector.broadcast %274 : vector<8x1xf32> to vector<8x32xf32>
    %276 = arith.addf %272, %275 : vector<8x32xf32>
    %277 = math.absf %276 : vector<8x32xf32>
    %cst_93 = arith.constant 9.99999996E-13 : f32
    %278 = vector.broadcast %cst_93 : f32 to vector<8x32xf32>
    %279 = arith.cmpf ogt, %277, %278 : vector<8x32xf32>
    %cst_94 = arith.constant 9.99999996E-13 : f32
    %280 = vector.broadcast %cst_94 : f32 to vector<8x32xf32>
    %281 = arith.select %279, %276, %280 : vector<8x32xi1>, vector<8x32xf32>
    %282 = tpu.reciprocal %281 {approx = true} : vector<8x32xf32> -> vector<8x32xf32>
    %283 = arith.mulf %262, %282 : vector<8x32xf32>
    %284 = arith.subf %250, %283 : vector<8x32xf32>
    %285 = arith.maximumf %174, %284 : vector<8x32xf32>
    %286 = arith.minimumf %175, %285 : vector<8x32xf32>
    %c0_95 = arith.constant 0 : index
    %c0_96 = arith.constant 0 : index
    %287 = vector.load %arg6[%c0_95, %c0_96] : memref<32x128xf32, #tpu.memory_space<vmem>>, vector<32x128xf32>
    %cst_97 = arith.constant dense<0.000000e+00> : vector<8x128xf32>
    %288 = tpu.matmul %286, %287, %cst_97 {dimension_numbers = #tpu.dot_dimension_numbers<[1], [0], [0], [1], [0, 0, 1, 1], [], []>} : vector<8x32xf32>, vector<32x128xf32>, vector<8x128xf32> -> vector<8x128xf32>
    %c0_98 = arith.constant 0 : index
    %c0_99 = arith.constant 0 : index
    %c0_100 = arith.constant 0 : index
    %289 = vector.load %arg15[%c0_98, %c0_99, %c0_100] : memref<8x1x128xf32, #tpu.memory_space<vmem>>, vector<8x1x128xf32>
    %290 = vector.shape_cast %289 : vector<8x1x128xf32> to vector<8x128xf32>
    %291 = vector.shape_cast %288 : vector<8x128xf32> to vector<8x1x128xf32>
    tpu.vector_store %arg15[%c0_98, %c0_99, %c0_100], %291 {strides = array<i32>} : memref<8x1x128xf32, #tpu.memory_space<vmem>>, vector<8x1x128xf32>,
    return
  }
  func.func @transform_0(%arg0: i32) -> i32 {
    %c0_i32 = arith.constant 0 : i32
    %c0_i32_0 = arith.constant 0 : i32
    return %c0_i32 : i32
  }
  func.func @transform_1(%arg0: i32) -> (i32, i32, i32) {
    %c0_i32 = arith.constant 0 : i32
    %c0_i32_0 = arith.constant 0 : i32
    %c0_i32_1 = arith.constant 0 : i32
    return %arg0, %c0_i32, %c0_i32_0 : i32, i32, i32
  }
  func.func @transform_2(%arg0: i32) -> (i32, i32, i32) {
    %c0_i32 = arith.constant 0 : i32
    %c0_i32_0 = arith.constant 0 : i32
    %c0_i32_1 = arith.constant 0 : i32
    return %arg0, %c0_i32, %c0_i32_0 : i32, i32, i32
  }
  func.func @transform_3(%arg0: i32) -> (i32, i32) {
    %c0_i32 = arith.constant 0 : i32
    %c0_i32_0 = arith.constant 0 : i32
    %c0_i32_1 = arith.constant 0 : i32
    return %c0_i32, %c0_i32_0 : i32, i32
  }
  func.func @transform_4(%arg0: i32) -> (i32, i32) {
    %c0_i32 = arith.constant 0 : i32
    %c0_i32_0 = arith.constant 0 : i32
    %c0_i32_1 = arith.constant 0 : i32
    return %c0_i32, %c0_i32_0 : i32, i32
  }
  func.func @transform_5(%arg0: i32) -> (i32, i32) {
    %c0_i32 = arith.constant 0 : i32
    %c0_i32_0 = arith.constant 0 : i32
    %c0_i32_1 = arith.constant 0 : i32
    return %c0_i32, %c0_i32_0 : i32, i32
  }
  func.func @transform_6(%arg0: i32) -> (i32, i32) {
    %c0_i32 = arith.constant 0 : i32
    %c0_i32_0 = arith.constant 0 : i32
    %c0_i32_1 = arith.constant 0 : i32
    return %c0_i32, %c0_i32_0 : i32, i32
  }
  func.func @transform_7(%arg0: i32) -> (i32, i32) {
    %c0_i32 = arith.constant 0 : i32
    %c0_i32_0 = arith.constant 0 : i32
    %c0_i32_1 = arith.constant 0 : i32
    return %c0_i32, %c0_i32_0 : i32, i32
  }
  func.func @transform_8(%arg0: i32) -> (i32, i32) {
    %c0_i32 = arith.constant 0 : i32
    %c0_i32_0 = arith.constant 0 : i32
    %c0_i32_1 = arith.constant 0 : i32
    return %c0_i32, %c0_i32_0 : i32, i32
  }
  func.func @transform_9(%arg0: i32) -> (i32, i32) {
    %c0_i32 = arith.constant 0 : i32
    %c0_i32_0 = arith.constant 0 : i32
    %c0_i32_1 = arith.constant 0 : i32
    return %c0_i32, %c0_i32_0 : i32, i32
  }
  func.func @transform_10(%arg0: i32) -> (i32, i32) {
    %c0_i32 = arith.constant 0 : i32
    %c0_i32_0 = arith.constant 0 : i32
    %c0_i32_1 = arith.constant 0 : i32
    return %c0_i32, %c0_i32_0 : i32, i32
  }
  func.func @transform_11(%arg0: i32) -> (i32, i32) {
    %c0_i32 = arith.constant 0 : i32
    %c0_i32_0 = arith.constant 0 : i32
    %c0_i32_1 = arith.constant 0 : i32
    return %c0_i32, %c0_i32_0 : i32, i32
  }
  func.func @transform_12(%arg0: i32) -> (i32, i32) {
    %c0_i32 = arith.constant 0 : i32
    %c0_i32_0 = arith.constant 0 : i32
    %c0_i32_1 = arith.constant 0 : i32
    return %c0_i32, %c0_i32_0 : i32, i32
  }
  func.func @transform_13(%arg0: i32) -> (i32, i32) {
    %c0_i32 = arith.constant 0 : i32
    %c0_i32_0 = arith.constant 0 : i32
    %c0_i32_1 = arith.constant 0 : i32
    return %c0_i32, %c0_i32_0 : i32, i32
  }
  func.func @transform_14(%arg0: i32) -> (i32, i32, i32) {
    %c0_i32 = arith.constant 0 : i32
    %c0_i32_0 = arith.constant 0 : i32
    %c0_i32_1 = arith.constant 0 : i32
    return %arg0, %c0_i32, %c0_i32_0 : i32, i32, i32
  }
}

</mosaic_0001>

<llo_original>
// kernel: tpu_custom_call.1
$region0: #{tpu_custom_call.1}
  #allocation0 [shape = 'u32[]', space=smem, size = 0x4, offset = 0x4, fixed_abs, tag = 'smem constant byte address 0x4 - core index']
  #allocation1 [shape = 'u32[72,128]{1,0:T(1,128)}', space=vmem, size = 0x9000, scoped, tag = 'internal scratch']
  %s0 = inlined_call_operand.vmem [shape: f32[3], index: 0, kind: input, shape index: {}]
  %s1 = inlined_call_operand.vmem [shape: f32[16,1,128], index: 1, kind: input, shape index: {}]
  %s2 = inlined_call_operand.vmem [shape: f32[16,1,128], index: 2, kind: input, shape index: {}]
  %s3 = inlined_call_operand.hbm [shape: f32[128,512], index: 3, kind: input, shape index: {}]
  %s4 = inlined_call_operand.vmem [shape: f32[128,32], index: 4, kind: input, shape index: {}]
  %s5 = inlined_call_operand.vmem [shape: f32[32,128], index: 5, kind: input, shape index: {}]
  %s6 = inlined_call_operand.vmem [shape: f32[1,64], index: 6, kind: input, shape index: {}]
  %s7 = inlined_call_operand.vmem [shape: f32[64,16], index: 7, kind: input, shape index: {}]
  %s8 = inlined_call_operand.vmem [shape: f32[1,16], index: 8, kind: input, shape index: {}]
  %s9 = inlined_call_operand.vmem [shape: f32[1,16], index: 9, kind: input, shape index: {}]
  %s10 = inlined_call_operand.vmem [shape: f32[1,128], index: 10, kind: input, shape index: {}]
  %s11 = inlined_call_operand.vmem [shape: f32[1,128], index: 11, kind: input, shape index: {}]
  %s12 = inlined_call_operand.vmem [shape: f32[1,128], index: 12, kind: input, shape index: {}]
  %s13 = inlined_call_operand.vmem [shape: f32[1,128], index: 13, kind: input, shape index: {}]
  %s14 = inlined_call_operand.hbm [shape: f32[16,1,128], index: 14, kind: output, shape index: {}]
  %s15 = sld [smem:[#allocation0]]
  $region97: #{tpu_custom_call.1} parent=0
    _
  %s17 = ssub.s32 1, %s15
  %s18 = scalar_select 0, %s17, %s15
  $region1: #{tpu_custom_call.1} parent=0
    #allocation2 [shape = 'u8[512]{0}', space=smem, size = 0x200, scoped, tag = 'input window, operand 0, single buffered']
    #allocation3 [shape = 's32[2]{0}', space=sflag, size = 0x8, scoped, tag = 'scoped memory for tpu_custom_call.1']
    #allocation4 [shape = 's32[2]{0}', space=sflag, size = 0x8, scoped, tag = 'scoped memory for tpu_custom_call.1']
    #allocation5 [shape = 's32[2]{0}', space=sflag, size = 0x8, scoped, tag = 'scoped memory for tpu_custom_call.1']
    #allocation6 [shape = 'u8[262144]{0}', space=vmem, size = 0x40000, scoped, tag = 'input window, operand 3, single buffered']
    #allocation7 [shape = 'u8[8192]{0}', space=vmem, size = 0x2000, scoped, tag = 'output window, operand 0']
    %19 = vsyncpa [#allocation5], 0
    %20 = vsyncpa [#allocation3], 0
    %21 = vsyncpa [#allocation4], 0
    %s22 = scalar_lea.sflag [#allocation4], 1
    %23 = vsyncpa %s22, 0
    loop: start=0, step=1, limit=4
    $region2: #{tpu_custom_call.1} parent=1 // loop_pre_header
      _
    $region3: #{tpu_custom_call.1} parent=1 // loop_header
      %s25 = sphi 0, %s29
      %p26 = scmp.ge.s32.totalorder %s25, 4
      %s33 = sphi 0, %s33
      %s35 = sphi 0, %s33
      %s36 = sphi 0, %s35
      %s50 = sphi 0, %s36
      %s56 = sphi 0, %s58
      %s59 = sphi 0, %s56
      %s60 = sphi 0, %s59
      %s76 = sphi 0, %s60
      %s82 = sphi 0, %s84
      %s85 = sphi 0, %s82
      %s86 = sphi 0, %s85
      %s102 = sphi 0, %s86
      %s106 = sphi 0, %s106
      %s108 = sphi 0, %s106
      %s109 = sphi 0, %s108
      %s123 = sphi 0, %s109
      %s127 = sphi 0, %s127
      %s129 = sphi 0, %s127
      %s130 = sphi 0, %s129
      %s144 = sphi 0, %s130
      %s148 = sphi 0, %s148
      %s150 = sphi 0, %s148
      %s151 = sphi 0, %s150
      %s165 = sphi 0, %s151
      %s169 = sphi 0, %s169
      %s171 = sphi 0, %s169
      %s172 = sphi 0, %s171
      %s186 = sphi 0, %s172
      %s190 = sphi 0, %s190
      %s192 = sphi 0, %s190
      %s193 = sphi 0, %s192
      %s207 = sphi 0, %s193
      %s211 = sphi 0, %s211
      %s213 = sphi 0, %s211
      %s214 = sphi 0, %s213
      %s228 = sphi 0, %s214
      %s232 = sphi 0, %s232
      %s234 = sphi 0, %s232
      %s235 = sphi 0, %s234
      %s249 = sphi 0, %s235
      %s253 = sphi 0, %s253
      %s255 = sphi 0, %s253
      %s256 = sphi 0, %s255
      %s270 = sphi 0, %s256
      %s274 = sphi 0, %s274
      %s276 = sphi 0, %s274
      %s277 = sphi 0, %s276
      %s291 = sphi 0, %s277
      %s295 = sphi 0, %s295
      %s297 = sphi 0, %s295
      %s298 = sphi 0, %s297
      %s312 = sphi 0, %s298
      %s316 = sphi 0, %s316
      %s318 = sphi 0, %s316
      %s319 = sphi 0, %s318
      %s333 = sphi 0, %s319
      %s339 = sphi 0, %s341
      %s342 = sphi 0, %s339
      %s343 = sphi 0, %s342
      %s359 = sphi 0, %s343
    $region4: #{tpu_custom_call.1} parent=1 // loop_header_branch
      %28 = sbr.rel (%p26) target = $region8
    $region5: #{tpu_custom_call.1} parent=1 // loop_body
      %s30 = ssub.s32 %s25, 1
      %s31 = ssub.s32 %s25, 2
      %s32 = sadd.s32 %s25, 1
      %s34 = sadd.s32 %s33, 1
      %p37 = scmp.eq.s32.totalorder %s25, 1
      %p38 = scmp.ne.s32.totalorder %s33, %s35
      %p39 = scmp.eq.s32.totalorder %s25, 0
      %p40 = por %p38, %p39
      %p41 = scmp.ne.s32.totalorder %s33, %s35
      %p42 = scmp.eq.s32.totalorder %s30, 1
      %p43 = por %p41, %p42
      %p44 = scmp.ne.s32.totalorder %s35, %s36
      %p45 = scmp.eq.s32.totalorder %s30, 0
      %p46 = por %p44, %p45
      %p47 = scmp.ne.s32.totalorder %s35, %s36
      %p48 = scmp.eq.s32.totalorder %s31, 1
      %p49 = por %p47, %p48
      %p51 = scmp.ne.s32.totalorder %s36, %s50
      %p52 = scmp.eq.s32.totalorder %s31, 0
      %p53 = por %p51, %p52
      %s54 = ssub.s32 %s25, %s32
      %p55 = scmp.eq.s32.totalorder %s54, 0
      %s57 = sadd.s32 %s56, 1
      %s58 = scalar_select %p55, %s56, %s57
      %p61 = pneg %p55
      %p62 = scmp.eq.s32.totalorder %s25, 1
      %p63 = por %p61, %p62
      %p64 = scmp.ne.s32.totalorder %s56, %s59
      %p65 = scmp.eq.s32.totalorder %s25, 0
      %p66 = por %p64, %p65
      %p67 = scmp.ne.s32.totalorder %s56, %s59
      %p68 = scmp.eq.s32.totalorder %s30, 1
      %p69 = por %p67, %p68
      %p70 = scmp.ne.s32.totalorder %s59, %s60
      %p71 = scmp.eq.s32.totalorder %s30, 0
      %p72 = por %p70, %p71
      %p73 = scmp.ne.s32.totalorder %s59, %s60
      %p74 = scmp.eq.s32.totalorder %s31, 1
      %p75 = por %p73, %p74
      %p77 = scmp.ne.s32.totalorder %s60, %s76
      %p78 = scmp.eq.s32.totalorder %s31, 0
      %p79 = por %p77, %p78
      %s80 = ssub.s32 %s25, %s32
      %p81 = scmp.eq.s32.totalorder %s80, 0
      %s83 = sadd.s32 %s82, 1
      %s84 = scalar_select %p81, %s82, %s83
      %p87 = pneg %p81
      %p88 = scmp.eq.s32.totalorder %s25, 1
      %p89 = por %p87, %p88
      %p90 = scmp.ne.s32.totalorder %s82, %s85
      %p91 = scmp.eq.s32.totalorder %s25, 0
      %p92 = por %p90, %p91
      %p93 = scmp.ne.s32.totalorder %s82, %s85
      %p94 = scmp.eq.s32.totalorder %s30, 1
      %p95 = por %p93, %p94
      %p96 = scmp.ne.s32.totalorder %s85, %s86
      %p97 = scmp.eq.s32.totalorder %s30, 0
      %p98 = por %p96, %p97
      %p99 = scmp.ne.s32.totalorder %s85, %s86
      %p100 = scmp.eq.s32.totalorder %s31, 1
      %p101 = por %p99, %p100
      %p103 = scmp.ne.s32.totalorder %s86, %s102
      %p104 = scmp.eq.s32.totalorder %s31, 0
      %p105 = por %p103, %p104
      %s107 = sadd.s32 %s106, 1
      %p110 = scmp.eq.s32.totalorder %s25, 1
      %p111 = scmp.ne.s32.totalorder %s106, %s108
      %p112 = scmp.eq.s32.totalorder %s25, 0
      %p113 = por %p111, %p112
      %p114 = scmp.ne.s32.totalorder %s106, %s108
      %p115 = scmp.eq.s32.totalorder %s30, 1
      %p116 = por %p114, %p115
      %p117 = scmp.ne.s32.totalorder %s108, %s109
      %p118 = scmp.eq.s32.totalorder %s30, 0
      %p119 = por %p117, %p118
      %p120 = scmp.ne.s32.totalorder %s108, %s109
      %p121 = scmp.eq.s32.totalorder %s31, 1
      %p122 = por %p120, %p121
      %p124 = scmp.ne.s32.totalorder %s109, %s123
      %p125 = scmp.eq.s32.totalorder %s31, 0
      %p126 = por %p124, %p125
      %s128 = sadd.s32 %s127, 1
      %p131 = scmp.eq.s32.totalorder %s25, 1
      %p132 = scmp.ne.s32.totalorder %s127, %s129
      %p133 = scmp.eq.s32.totalorder %s25, 0
      %p134 = por %p132, %p133
      %p135 = scmp.ne.s32.totalorder %s127, %s129
      %p136 = scmp.eq.s32.totalorder %s30, 1
      %p137 = por %p135, %p136
      %p138 = scmp.ne.s32.totalorder %s129, %s130
      %p139 = scmp.eq.s32.totalorder %s30, 0
      %p140 = por %p138, %p139
      %p141 = scmp.ne.s32.totalorder %s129, %s130
      %p142 = scmp.eq.s32.totalorder %s31, 1
      %p143 = por %p141, %p142
      %p145 = scmp.ne.s32.totalorder %s130, %s144
      %p146 = scmp.eq.s32.totalorder %s31, 0
      %p147 = por %p145, %p146
      %s149 = sadd.s32 %s148, 1
      %p152 = scmp.eq.s32.totalorder %s25, 1
      %p153 = scmp.ne.s32.totalorder %s148, %s150
      %p154 = scmp.eq.s32.totalorder %s25, 0
      %p155 = por %p153, %p154
      %p156 = scmp.ne.s32.totalorder %s148, %s150
      %p157 = scmp.eq.s32.totalorder %s30, 1
      %p158 = por %p156, %p157
      %p159 = scmp.ne.s32.totalorder %s150, %s151
      %p160 = scmp.eq.s32.totalorder %s30, 0
      %p161 = por %p159, %p160
      %p162 = scmp.ne.s32.totalorder %s150, %s151
      %p163 = scmp.eq.s32.totalorder %s31, 1
      %p164 = por %p162, %p163
      %p166 = scmp.ne.s32.totalorder %s151, %s165
      %p167 = scmp.eq.s32.totalorder %s31, 0
      %p168 = por %p166, %p167
      %s170 = sadd.s32 %s169, 1
      %p173 = scmp.eq.s32.totalorder %s25, 1
      %p174 = scmp.ne.s32.totalorder %s169, %s171
      %p175 = scmp.eq.s32.totalorder %s25, 0
      %p176 = por %p174, %p175
      %p177 = scmp.ne.s32.totalorder %s169, %s171
      %p178 = scmp.eq.s32.totalorder %s30, 1
      %p179 = por %p177, %p178
      %p180 = scmp.ne.s32.totalorder %s171, %s172
      %p181 = scmp.eq.s32.totalorder %s30, 0
      %p182 = por %p180, %p181
      %p183 = scmp.ne.s32.totalorder %s171, %s172
      %p184 = scmp.eq.s32.totalorder %s31, 1
      %p185 = por %p183, %p184
      %p187 = scmp.ne.s32.totalorder %s172, %s186
      %p188 = scmp.eq.s32.totalorder %s31, 0
      %p189 = por %p187, %p188
      %s191 = sadd.s32 %s190, 1
      %p194 = scmp.eq.s32.totalorder %s25, 1
      %p195 = scmp.ne.s32.totalorder %s190, %s192
      %p196 = scmp.eq.s32.totalorder %s25, 0
      %p197 = por %p195, %p196
      %p198 = scmp.ne.s32.totalorder %s190, %s192
      %p199 = scmp.eq.s32.totalorder %s30, 1
      %p200 = por %p198, %p199
      %p201 = scmp.ne.s32.totalorder %s192, %s193
      %p202 = scmp.eq.s32.totalorder %s30, 0
      %p203 = por %p201, %p202
      %p204 = scmp.ne.s32.totalorder %s192, %s193
      %p205 = scmp.eq.s32.totalorder %s31, 1
      %p206 = por %p204, %p205
      %p208 = scmp.ne.s32.totalorder %s193, %s207
      %p209 = scmp.eq.s32.totalorder %s31, 0
      %p210 = por %p208, %p209
      %s212 = sadd.s32 %s211, 1
      %p215 = scmp.eq.s32.totalorder %s25, 1
      %p216 = scmp.ne.s32.totalorder %s211, %s213
      %p217 = scmp.eq.s32.totalorder %s25, 0
      %p218 = por %p216, %p217
      %p219 = scmp.ne.s32.totalorder %s211, %s213
      %p220 = scmp.eq.s32.totalorder %s30, 1
      %p221 = por %p219, %p220
      %p222 = scmp.ne.s32.totalorder %s213, %s214
      %p223 = scmp.eq.s32.totalorder %s30, 0
      %p224 = por %p222, %p223
      %p225 = scmp.ne.s32.totalorder %s213, %s214
      %p226 = scmp.eq.s32.totalorder %s31, 1
      %p227 = por %p225, %p226
      %p229 = scmp.ne.s32.totalorder %s214, %s228
      %p230 = scmp.eq.s32.totalorder %s31, 0
      %p231 = por %p229, %p230
      %s233 = sadd.s32 %s232, 1
      %p236 = scmp.eq.s32.totalorder %s25, 1
      %p237 = scmp.ne.s32.totalorder %s232, %s234
      %p238 = scmp.eq.s32.totalorder %s25, 0
      %p239 = por %p237, %p238
      %p240 = scmp.ne.s32.totalorder %s232, %s234
      %p241 = scmp.eq.s32.totalorder %s30, 1
      %p242 = por %p240, %p241
      %p243 = scmp.ne.s32.totalorder %s234, %s235
      %p244 = scmp.eq.s32.totalorder %s30, 0
      %p245 = por %p243, %p244
      %p246 = scmp.ne.s32.totalorder %s234, %s235
      %p247 = scmp.eq.s32.totalorder %s31, 1
      %p248 = por %p246, %p247
      %p250 = scmp.ne.s32.totalorder %s235, %s249
      %p251 = scmp.eq.s32.totalorder %s31, 0
      %p252 = por %p250, %p251
      %s254 = sadd.s32 %s253, 1
      %p257 = scmp.eq.s32.totalorder %s25, 1
      %p258 = scmp.ne.s32.totalorder %s253, %s255
      %p259 = scmp.eq.s32.totalorder %s25, 0
      %p260 = por %p258, %p259
      %p261 = scmp.ne.s32.totalorder %s253, %s255
      %p262 = scmp.eq.s32.totalorder %s30, 1
      %p263 = por %p261, %p262
      %p264 = scmp.ne.s32.totalorder %s255, %s256
      %p265 = scmp.eq.s32.totalorder %s30, 0
      %p266 = por %p264, %p265
      %p267 = scmp.ne.s32.totalorder %s255, %s256
      %p268 = scmp.eq.s32.totalorder %s31, 1
      %p269 = por %p267, %p268
      %p271 = scmp.ne.s32.totalorder %s256, %s270
      %p272 = scmp.eq.s32.totalorder %s31, 0
      %p273 = por %p271, %p272
      %s275 = sadd.s32 %s274, 1
      %p278 = scmp.eq.s32.totalorder %s25, 1
      %p279 = scmp.ne.s32.totalorder %s274, %s276
      %p280 = scmp.eq.s32.totalorder %s25, 0
      %p281 = por %p279, %p280
      %p282 = scmp.ne.s32.totalorder %s274, %s276
      %p283 = scmp.eq.s32.totalorder %s30, 1
      %p284 = por %p282, %p283
      %p285 = scmp.ne.s32.totalorder %s276, %s277
      %p286 = scmp.eq.s32.totalorder %s30, 0
      %p287 = por %p285, %p286
      %p288 = scmp.ne.s32.totalorder %s276, %s277
      %p289 = scmp.eq.s32.totalorder %s31, 1
      %p290 = por %p288, %p289
      %p292 = scmp.ne.s32.totalorder %s277, %s291
      %p293 = scmp.eq.s32.totalorder %s31, 0
      %p294 = por %p292, %p293
      %s296 = sadd.s32 %s295, 1
      %p299 = scmp.eq.s32.totalorder %s25, 1
      %p300 = scmp.ne.s32.totalorder %s295, %s297
      %p301 = scmp.eq.s32.totalorder %s25, 0
      %p302 = por %p300, %p301
      %p303 = scmp.ne.s32.totalorder %s295, %s297
      %p304 = scmp.eq.s32.totalorder %s30, 1
      %p305 = por %p303, %p304
      %p306 = scmp.ne.s32.totalorder %s297, %s298
      %p307 = scmp.eq.s32.totalorder %s30, 0
      %p308 = por %p306, %p307
      %p309 = scmp.ne.s32.totalorder %s297, %s298
      %p310 = scmp.eq.s32.totalorder %s31, 1
      %p311 = por %p309, %p310
      %p313 = scmp.ne.s32.totalorder %s298, %s312
      %p314 = scmp.eq.s32.totalorder %s31, 0
      %p315 = por %p313, %p314
      %s317 = sadd.s32 %s316, 1
      %p320 = scmp.eq.s32.totalorder %s25, 1
      %p321 = scmp.ne.s32.totalorder %s316, %s318
      %p322 = scmp.eq.s32.totalorder %s25, 0
      %p323 = por %p321, %p322
      %p324 = scmp.ne.s32.totalorder %s316, %s318
      %p325 = scmp.eq.s32.totalorder %s30, 1
      %p326 = por %p324, %p325
      %p327 = scmp.ne.s32.totalorder %s318, %s319
      %p328 = scmp.eq.s32.totalorder %s30, 0
      %p329 = por %p327, %p328
      %p330 = scmp.ne.s32.totalorder %s318, %s319
      %p331 = scmp.eq.s32.totalorder %s31, 1
      %p332 = por %p330, %p331
      %p334 = scmp.ne.s32.totalorder %s319, %s333
      %p335 = scmp.eq.s32.totalorder %s31, 0
      %p336 = por %p334, %p335
      %s337 = ssub.s32 %s25, %s32
      %p338 = scmp.eq.s32.totalorder %s337, 0
      %s340 = sadd.s32 %s339, 1
      %s341 = scalar_select %p338, %s339, %s340
      %p344 = pneg %p338
      %p345 = scmp.eq.s32.totalorder %s25, 1
      %p346 = por %p344, %p345
      %p347 = scmp.ne.s32.totalorder %s339, %s342
      %p348 = scmp.eq.s32.totalorder %s25, 0
      %p349 = por %p347, %p348
      %p350 = scmp.ne.s32.totalorder %s339, %s342
      %p351 = scmp.eq.s32.totalorder %s30, 1
      %p352 = por %p350, %p351
      %p353 = scmp.ne.s32.totalorder %s342, %s343
      %p354 = scmp.eq.s32.totalorder %s30, 0
      %p355 = por %p353, %p354
      %p356 = scmp.ne.s32.totalorder %s342, %s343
      %p357 = scmp.eq.s32.totalorder %s31, 1
      %p358 = por %p356, %p357
      %p360 = scmp.ne.s32.totalorder %s343, %s359
      %p361 = scmp.eq.s32.totalorder %s31, 0
      %p362 = por %p360, %p361
      %p363 = scmp.le.s32.totalorder 1, %s25
      %p364 = scmp.lt.s32.totalorder %s25, 3
      %p365 = pnand %p363, %p364
      %p366 = pneg %p365
      // Predicated region
      $region9: #{tpu_custom_call.1} parent=5 // pred_check
        _
      $region10: #{tpu_custom_call.1} parent=5 // pred_check_branch
        %368 = sbr.rel (%p365) target = $region12
      $region11: #{tpu_custom_call.1} parent=5 // pred_region
        %s369 = ssub.s32 %s25, 1
        // Predicated region
        $region13: #{tpu_custom_call.1} parent=11 // pred_check
          %p370 = pneg %p46
        $region14: #{tpu_custom_call.1} parent=11 // pred_check_branch
          %372 = sbr.rel (%p370) target = $region16
        $region15: #{tpu_custom_call.1} parent=11 // pred_region
          %374 = vsyncadd [#allocation5], 0
          %s376 = sshll.u32 %s0, 4
          %s377 = int_to_ptr.vmem [resolvable:$true] %s376
          %379 = dma.vmem_to_smem %s377, 16, [#allocation2], [#allocation5]
        $region16: #{tpu_custom_call.1} parent=11 // pred_fallthru
          _
        // Predicated region
        $region17: #{tpu_custom_call.1} parent=11 // pred_check
          %p380 = pneg %p119
        $region18: #{tpu_custom_call.1} parent=11 // pred_check_branch
          %382 = sbr.rel (%p380) target = $region20
        $region19: #{tpu_custom_call.1} parent=11 // pred_region
          %384 = vsyncadd [#allocation3], 0
          %s385 = sshll.u32 %s3, 4
          %s386 = int_to_ptr.hbm [resolvable:$true] %s385
          %s387 = sshll.u32 [#allocation6], 4
          %s388 = int_to_ptr.vmem [resolvable:$true] %s387
          %393 = dma.hbm_to_vmem [thread:$0]  %s386, 8192, %s388, [#allocation3], 512, 512, 32
        $region20: #{tpu_custom_call.1} parent=11 // pred_fallthru
          _
        // Predicated region
        $region21: #{tpu_custom_call.1} parent=11 // pred_check
          %p394 = pneg %p140
        $region22: #{tpu_custom_call.1} parent=11 // pred_check_branch
          %396 = sbr.rel (%p394) target = $region24
        $region23: #{tpu_custom_call.1} parent=11 // pred_region
          _
        $region24: #{tpu_custom_call.1} parent=11 // pred_fallthru
          _
        // Predicated region
        $region25: #{tpu_custom_call.1} parent=11 // pred_check
          %p397 = pneg %p161
        $region26: #{tpu_custom_call.1} parent=11 // pred_check_branch
          %399 = sbr.rel (%p397) target = $region28
        $region27: #{tpu_custom_call.1} parent=11 // pred_region
          _
        $region28: #{tpu_custom_call.1} parent=11 // pred_fallthru
          _
        // Predicated region
        $region29: #{tpu_custom_call.1} parent=11 // pred_check
          %p400 = pneg %p182
        $region30: #{tpu_custom_call.1} parent=11 // pred_check_branch
          %402 = sbr.rel (%p400) target = $region32
        $region31: #{tpu_custom_call.1} parent=11 // pred_region
          _
        $region32: #{tpu_custom_call.1} parent=11 // pred_fallthru
          _
        // Predicated region
        $region33: #{tpu_custom_call.1} parent=11 // pred_check
          %p403 = pneg %p203
        $region34: #{tpu_custom_call.1} parent=11 // pred_check_branch
          %405 = sbr.rel (%p403) target = $region36
        $region35: #{tpu_custom_call.1} parent=11 // pred_region
          _
        $region36: #{tpu_custom_call.1} parent=11 // pred_fallthru
          _
        // Predicated region
        $region37: #{tpu_custom_call.1} parent=11 // pred_check
          %p406 = pneg %p224
        $region38: #{tpu_custom_call.1} parent=11 // pred_check_branch
          %408 = sbr.rel (%p406) target = $region40
        $region39: #{tpu_custom_call.1} parent=11 // pred_region
          _
        $region40: #{tpu_custom_call.1} parent=11 // pred_fallthru
          _
        // Predicated region
        $region41: #{tpu_custom_call.1} parent=11 // pred_check
          %p409 = pneg %p245
        $region42: #{tpu_custom_call.1} parent=11 // pred_check_branch
          %411 = sbr.rel (%p409) target = $region44
        $region43: #{tpu_custom_call.1} parent=11 // pred_region
          _
        $region44: #{tpu_custom_call.1} parent=11 // pred_fallthru
          _
        // Predicated region
        $region45: #{tpu_custom_call.1} parent=11 // pred_check
          %p412 = pneg %p266
        $region46: #{tpu_custom_call.1} parent=11 // pred_check_branch
          %414 = sbr.rel (%p412) target = $region48
        $region47: #{tpu_custom_call.1} parent=11 // pred_region
          _
        $region48: #{tpu_custom_call.1} parent=11 // pred_fallthru
          _
        // Predicated region
        $region49: #{tpu_custom_call.1} parent=11 // pred_check
          %p415 = pneg %p287
        $region50: #{tpu_custom_call.1} parent=11 // pred_check_branch
          %417 = sbr.rel (%p415) target = $region52
        $region51: #{tpu_custom_call.1} parent=11 // pred_region
          _
        $region52: #{tpu_custom_call.1} parent=11 // pred_fallthru
          _
        // Predicated region
        $region53: #{tpu_custom_call.1} parent=11 // pred_check
          %p418 = pneg %p308
        $region54: #{tpu_custom_call.1} parent=11 // pred_check_branch
          %420 = sbr.rel (%p418) target = $region56
        $region55: #{tpu_custom_call.1} parent=11 // pred_region
          _
        $region56: #{tpu_custom_call.1} parent=11 // pred_fallthru
          _
        // Predicated region
        $region57: #{tpu_custom_call.1} parent=11 // pred_check
          %p421 = pneg %p329
        $region58: #{tpu_custom_call.1} parent=11 // pred_check_branch
          %423 = sbr.rel (%p421) target = $region60
        $region59: #{tpu_custom_call.1} parent=11 // pred_region
          _
        $region60: #{tpu_custom_call.1} parent=11 // pred_fallthru
          _
      $region12: #{tpu_custom_call.1} parent=5 // pred_fallthru
        _
      %p424 = scmp.lt.s32.totalorder %s25, 2
      // Predicated region
      $region61: #{tpu_custom_call.1} parent=5 // pred_check
        %p425 = pneg %p424
      $region62: #{tpu_custom_call.1} parent=5 // pred_check_branch
        %427 = sbr.rel (%p425) target = $region64
      $region63: #{tpu_custom_call.1} parent=5 // pred_region
        // Predicated region
        $region65: #{tpu_custom_call.1} parent=63 // pred_check
          %p428 = pneg %p66
        $region66: #{tpu_custom_call.1} parent=63 // pred_check_branch
          %430 = sbr.rel (%p428) target = $region68
        $region67: #{tpu_custom_call.1} parent=63 // pred_region
          %s431 = smul.u32 8, %s25
          %p432 = scmp.lt.s32.totalorder %s431, 15
          %s433 = scalar_select %p432, %s431, 15
          %s434 = scalar_lea.vmem %s1, %s433
          %s435 = smul.u32 8, %s25
        $region68: #{tpu_custom_call.1} parent=63 // pred_fallthru
          _
        // Predicated region
        $region69: #{tpu_custom_call.1} parent=63 // pred_check
          %p436 = pneg %p92
        $region70: #{tpu_custom_call.1} parent=63 // pred_check_branch
          %438 = sbr.rel (%p436) target = $region72
        $region71: #{tpu_custom_call.1} parent=63 // pred_region
          %s439 = smul.u32 8, %s25
          %p440 = scmp.lt.s32.totalorder %s439, 15
          %s441 = scalar_select %p440, %s439, 15
          %s442 = scalar_lea.vmem %s2, %s441
          %s443 = smul.u32 8, %s25
        $region72: #{tpu_custom_call.1} parent=63 // pred_fallthru
          _
      $region64: #{tpu_custom_call.1} parent=5 // pred_fallthru
        _
      %p444 = scmp.le.s32.totalorder 1, %s25
      %p445 = scmp.lt.s32.totalorder %s25, 3
      %p446 = pnand %p444, %p445
      %p447 = pneg %p446
      // Predicated region
      $region73: #{tpu_custom_call.1} parent=5 // pred_check
        _
      $region74: #{tpu_custom_call.1} parent=5 // pred_check_branch
        %449 = sbr.rel (%p446) target = $region76
      $region75: #{tpu_custom_call.1} parent=5 // pred_region
        %s450 = ssub.s32 %s25, 1
        // Predicated region
        $region77: #{tpu_custom_call.1} parent=75 // pred_check
          %p451 = pneg %p46
        $region78: #{tpu_custom_call.1} parent=75 // pred_check_branch
          %453 = sbr.rel (%p451) target = $region80
        $region79: #{tpu_custom_call.1} parent=75 // pred_region
          %455 = dma.done [#allocation5], 16
        $region80: #{tpu_custom_call.1} parent=75 // pred_fallthru
          _
        // Predicated region
        $region81: #{tpu_custom_call.1} parent=75 // pred_check
          %p456 = pneg %p119
        $region82: #{tpu_custom_call.1} parent=75 // pred_check_branch
          %458 = sbr.rel (%p456) target = $region84
        $region83: #{tpu_custom_call.1} parent=75 // pred_region
          %460 = dma.done [#allocation3], 8192
        $region84: #{tpu_custom_call.1} parent=75 // pred_fallthru
          _
        %461 = sfence
        %p462 = pneg %p46
        %p463 = pneg %p43
        %s464 = smul.u32 8, %s30
        %p465 = scmp.lt.s32.totalorder %s464, 15
        %s466 = scalar_select %p465, %s464, 15
        %s467 = scalar_lea.vmem %s1, %s466
        %p468 = pneg %p72
        %p469 = pneg %p69
        %s470 = smul.u32 8, %s30
        %p471 = scmp.lt.s32.totalorder %s470, 15
        %s472 = scalar_select %p471, %s470, 15
        %s473 = scalar_lea.vmem %s2, %s472
        %p474 = pneg %p98
        %p475 = pneg %p95
        %p476 = pneg %p119
        %p477 = pneg %p116
        %p478 = pneg %p140
        %p479 = pneg %p137
        %p480 = pneg %p161
        %p481 = pneg %p158
        %p482 = pneg %p182
        %p483 = pneg %p179
        %p484 = pneg %p203
        %p485 = pneg %p200
        %p486 = pneg %p224
        %p487 = pneg %p221
        %p488 = pneg %p245
        %p489 = pneg %p242
        %p490 = pneg %p266
        %p491 = pneg %p263
        %p492 = pneg %p287
        %p493 = pneg %p284
        %p494 = pneg %p308
        %p495 = pneg %p305
        %p496 = pneg %p329
        %p497 = pneg %p326
        %p498 = pneg %p355
        %p499 = pneg %p352
        %s500 = sand.u32 %s342, 1
        %s501 = scalar_lea.sflag [#allocation4], %s500
        %s502 = sand.u32 %s342, 1
        %s503 = smul.addr %s502, 8
        %s504 = scalar_lea.vmem [#allocation7], %s503
        %s505 = smul.u32 8, %s30
        %p506 = scmp.lt.s32.totalorder %s505, 15
        %s507 = scalar_select %p506, %s505, 15
        %s508 = scalar_lea.vmem %s1, %s507
        %s509 = smul.u32 8, %s30
        %s510 = smul.u32 8, %s30
        %p511 = scmp.lt.s32.totalorder %s510, 15
        %s512 = scalar_select %p511, %s510, 15
        %s513 = scalar_lea.vmem %s2, %s512
        %s514 = smul.u32 8, %s30
        %s515 = smul.u32 8, %s30
        %v516 = vld [vmem:[%s508] sm:$0x1]
        %v517 = vld [vmem:[%s508 + $0x1] sm:$0x1]
        %v518 = vld [vmem:[%s508 + $0x2] sm:$0x1]
        %v519 = vld [vmem:[%s508 + $0x3] sm:$0x1]
        %v520 = vld [vmem:[%s508 + $0x4] sm:$0x1]
        %v521 = vld [vmem:[%s508 + $0x5] sm:$0x1]
        %v522 = vld [vmem:[%s508 + $0x6] sm:$0x1]
        %v523 = vld [vmem:[%s508 + $0x7] sm:$0x1]
        %v524 = vld [vmem:[%s513] sm:$0x1]
        %v525 = vld [vmem:[%s513 + $0x1] sm:$0x1]
        %v526 = vld [vmem:[%s513 + $0x2] sm:$0x1]
        %v527 = vld [vmem:[%s513 + $0x3] sm:$0x1]
        %v528 = vld [vmem:[%s513 + $0x4] sm:$0x1]
        %v529 = vld [vmem:[%s513 + $0x5] sm:$0x1]
        %v530 = vld [vmem:[%s513 + $0x6] sm:$0x1]
        %v531 = vld [vmem:[%s513 + $0x7] sm:$0x1]
        %s532 = sld [smem:[#allocation2]]
        %s533 = sld [smem:[#allocation2 + $0x1]]
        %s534 = sld [smem:[#allocation2 + $0x2]]
        %v535 = vld [vmem:[#allocation6] sm:$0xff]
        %v536 = vld [vmem:[#allocation6 + $0x8] sm:$0xff]
        %v537 = vld [vmem:[#allocation6 + $0x10] sm:$0xff]
        %v538 = vld [vmem:[#allocation6 + $0x18] sm:$0xff]
        %v539 = vld [vmem:[#allocation6 + $0x20] sm:$0xff]
        %v540 = vld [vmem:[#allocation6 + $0x28] sm:$0xff]
        %v541 = vld [vmem:[#allocation6 + $0x30] sm:$0xff]
        %v542 = vld [vmem:[#allocation6 + $0x38] sm:$0xff]
        %v543 = vld [vmem:[#allocation6 + $0x40] sm:$0xff]
        %v544 = vld [vmem:[#allocation6 + $0x48] sm:$0xff]
        %v545 = vld [vmem:[#allocation6 + $0x50] sm:$0xff]
        %v546 = vld [vmem:[#allocation6 + $0x58] sm:$0xff]
        %v547 = vld [vmem:[#allocation6 + $0x60] sm:$0xff]
        %v548 = vld [vmem:[#allocation6 + $0x68] sm:$0xff]
        %v549 = vld [vmem:[#allocation6 + $0x70] sm:$0xff]
        %v550 = vld [vmem:[#allocation6 + $0x78] sm:$0xff]
        %v551 = vld [vmem:[#allocation6 + $0x80] sm:$0xff]
        %v552 = vld [vmem:[#allocation6 + $0x88] sm:$0xff]
        %v553 = vld [vmem:[#allocation6 + $0x90] sm:$0xff]
        %v554 = vld [vmem:[#allocation6 + $0x98] sm:$0xff]
        %v555 = vld [vmem:[#allocation6 + $0xa0] sm:$0xff]
        %v556 = vld [vmem:[#allocation6 + $0xa8] sm:$0xff]
        %v557 = vld [vmem:[#allocation6 + $0xb0] sm:$0xff]
        %v558 = vld [vmem:[#allocation6 + $0xb8] sm:$0xff]
        %v559 = vld [vmem:[#allocation6 + $0xc0] sm:$0xff]
        %v560 = vld [vmem:[#allocation6 + $0xc8] sm:$0xff]
        %v561 = vld [vmem:[#allocation6 + $0xd0] sm:$0xff]
        %v562 = vld [vmem:[#allocation6 + $0xd8] sm:$0xff]
        %v563 = vld [vmem:[#allocation6 + $0xe0] sm:$0xff]
        %v564 = vld [vmem:[#allocation6 + $0xe8] sm:$0xff]
        %v565 = vld [vmem:[#allocation6 + $0xf0] sm:$0xff]
        %v566 = vld [vmem:[#allocation6 + $0xf8] sm:$0xff]
        %v567 = vld [vmem:[#allocation6 + $0x100] sm:$0xff]
        %v568 = vld [vmem:[#allocation6 + $0x108] sm:$0xff]
        %v569 = vld [vmem:[#allocation6 + $0x110] sm:$0xff]
        %v570 = vld [vmem:[#allocation6 + $0x118] sm:$0xff]
        %v571 = vld [vmem:[#allocation6 + $0x120] sm:$0xff]
        %v572 = vld [vmem:[#allocation6 + $0x128] sm:$0xff]
        %v573 = vld [vmem:[#allocation6 + $0x130] sm:$0xff]
        %v574 = vld [vmem:[#allocation6 + $0x138] sm:$0xff]
        %v575 = vld [vmem:[#allocation6 + $0x140] sm:$0xff]
        %v576 = vld [vmem:[#allocation6 + $0x148] sm:$0xff]
        %v577 = vld [vmem:[#allocation6 + $0x150] sm:$0xff]
        %v578 = vld [vmem:[#allocation6 + $0x158] sm:$0xff]
        %v579 = vld [vmem:[#allocation6 + $0x160] sm:$0xff]
        %v580 = vld [vmem:[#allocation6 + $0x168] sm:$0xff]
        %v581 = vld [vmem:[#allocation6 + $0x170] sm:$0xff]
        %v582 = vld [vmem:[#allocation6 + $0x178] sm:$0xff]
        %v583 = vld [vmem:[#allocation6 + $0x180] sm:$0xff]
        %v584 = vld [vmem:[#allocation6 + $0x188] sm:$0xff]
        %v585 = vld [vmem:[#allocation6 + $0x190] sm:$0xff]
        %v586 = vld [vmem:[#allocation6 + $0x198] sm:$0xff]
        %v587 = vld [vmem:[#allocation6 + $0x1a0] sm:$0xff]
        %v588 = vld [vmem:[#allocation6 + $0x1a8] sm:$0xff]
        %v589 = vld [vmem:[#allocation6 + $0x1b0] sm:$0xff]
        %v590 = vld [vmem:[#allocation6 + $0x1b8] sm:$0xff]
        %v591 = vld [vmem:[#allocation6 + $0x1c0] sm:$0xff]
        %v592 = vld [vmem:[#allocation6 + $0x1c8] sm:$0xff]
        %v593 = vld [vmem:[#allocation6 + $0x1d0] sm:$0xff]
        %v594 = vld [vmem:[#allocation6 + $0x1d8] sm:$0xff]
        %v595 = vld [vmem:[#allocation6 + $0x1e0] sm:$0xff]
        %v596 = vld [vmem:[#allocation6 + $0x1e8] sm:$0xff]
        %v597 = vld [vmem:[#allocation6 + $0x1f0] sm:$0xff]
        %v598 = vld [vmem:[#allocation6 + $0x1f8] sm:$0xff]
        %607 = vst [vmem:[#allocation1] ss:$9 sm:$0xff] %v516
        %s608 = scalar_lea.vmem [#allocation1], 1
        %609 = vst [vmem:[%s608] ss:$9 sm:$0xff] %v517
        %s610 = scalar_lea.vmem [#allocation1], 2
        %611 = vst [vmem:[%s610] ss:$9 sm:$0xff] %v518
        %s612 = scalar_lea.vmem [#allocation1], 3
        %613 = vst [vmem:[%s612] ss:$9 sm:$0xff] %v519
        %s614 = scalar_lea.vmem [#allocation1], 4
        %615 = vst [vmem:[%s614] ss:$9 sm:$0xff] %v520
        %s616 = scalar_lea.vmem [#allocation1], 5
        %617 = vst [vmem:[%s616] ss:$9 sm:$0xff] %v521
        %s618 = scalar_lea.vmem [#allocation1], 6
        %619 = vst [vmem:[%s618] ss:$9 sm:$0xff] %v522
        %s620 = scalar_lea.vmem [#allocation1], 7
        %621 = vst [vmem:[%s620] ss:$9 sm:$0xff] %v523
        %v622 = vld [vmem:[#allocation1] sm:$0xff]
        %624 = vmatpush.msra.mxu0 %v595
        %625 = vmatpush.msra.mxu0 %v591
        %626 = vmatpush.msra.mxu0 %v587
        %627 = vmatpush.msra.mxu0 %v583
        %628 = vmatpush.msra.mxu0 %v579
        %629 = vmatpush.msra.mxu0 %v575
        %630 = vmatpush.msra.mxu0 %v571
        %631 = vmatpush.msra.mxu0 %v567
        %632 = vmatpush.msra.mxu0 %v563
        %633 = vmatpush.msra.mxu0 %v559
        %634 = vmatpush.msra.mxu0 %v555
        %635 = vmatpush.msra.mxu0 %v551
        %636 = vmatpush.msra.mxu0 %v547
        %637 = vmatpush.msra.mxu0 %v543
        %638 = vmatpush.msra.mxu0 %v539
        %639 = vmatpush.msra.mxu0 %v535
        %640 = vmatmul.f32.gmra.mxu0 %v622
        %v641 = vpop.f32.mrf.mxu0
        %v642 = vadd.f32 0.0, %v641
        %643 = vdwg.mxu0
        %644 = vmatpush.msra.mxu0 %v596
        %645 = vmatpush.msra.mxu0 %v592
        %646 = vmatpush.msra.mxu0 %v588
        %647 = vmatpush.msra.mxu0 %v584
        %648 = vmatpush.msra.mxu0 %v580
        %649 = vmatpush.msra.mxu0 %v576
        %650 = vmatpush.msra.mxu0 %v572
        %651 = vmatpush.msra.mxu0 %v568
        %652 = vmatpush.msra.mxu0 %v564
        %653 = vmatpush.msra.mxu0 %v560
        %654 = vmatpush.msra.mxu0 %v556
        %655 = vmatpush.msra.mxu0 %v552
        %656 = vmatpush.msra.mxu0 %v548
        %657 = vmatpush.msra.mxu0 %v544
        %658 = vmatpush.msra.mxu0 %v540
        %659 = vmatpush.msra.mxu0 %v536
        %660 = vmatmul.f32.gmra.mxu0 %v622
        %v661 = vpop.f32.mrf.mxu0
        %v662 = vadd.f32 0.0, %v661
        %663 = vdwg.mxu0
        %664 = vmatpush.msra.mxu0 %v597
        %665 = vmatpush.msra.mxu0 %v593
        %666 = vmatpush.msra.mxu0 %v589
        %667 = vmatpush.msra.mxu0 %v585
        %668 = vmatpush.msra.mxu0 %v581
        %669 = vmatpush.msra.mxu0 %v577
        %670 = vmatpush.msra.mxu0 %v573
        %671 = vmatpush.msra.mxu0 %v569
        %672 = vmatpush.msra.mxu0 %v565
        %673 = vmatpush.msra.mxu0 %v561
        %674 = vmatpush.msra.mxu0 %v557
        %675 = vmatpush.msra.mxu0 %v553
        %676 = vmatpush.msra.mxu0 %v549
        %677 = vmatpush.msra.mxu0 %v545
        %678 = vmatpush.msra.mxu0 %v541
        %679 = vmatpush.msra.mxu0 %v537
        %680 = vmatmul.f32.gmra.mxu0 %v622
        %v681 = vpop.f32.mrf.mxu0
        %v682 = vadd.f32 0.0, %v681
        %683 = vdwg.mxu0
        %684 = vmatpush.msra.mxu0 %v598
        %685 = vmatpush.msra.mxu0 %v594
        %686 = vmatpush.msra.mxu0 %v590
        %687 = vmatpush.msra.mxu0 %v586
        %688 = vmatpush.msra.mxu0 %v582
        %689 = vmatpush.msra.mxu0 %v578
        %690 = vmatpush.msra.mxu0 %v574
        %691 = vmatpush.msra.mxu0 %v570
        %692 = vmatpush.msra.mxu0 %v566
        %693 = vmatpush.msra.mxu0 %v562
        %694 = vmatpush.msra.mxu0 %v558
        %695 = vmatpush.msra.mxu0 %v554
        %696 = vmatpush.msra.mxu0 %v550
        %697 = vmatpush.msra.mxu0 %v546
        %698 = vmatpush.msra.mxu0 %v542
        %699 = vmatpush.msra.mxu0 %v538
        %700 = vmatmul.f32.gmra.mxu0 %v622
        %v701 = vpop.f32.mrf.mxu0
        %v702 = vadd.f32 0.0, %v701
        %703 = vdwg.mxu0
        %v704 = vld [vmem:[%s4] sm:$0xff]
        %v705 = vld [vmem:[%s4 + $0x8] sm:$0xff]
        %v706 = vld [vmem:[%s4 + $0x10] sm:$0xff]
        %v707 = vld [vmem:[%s4 + $0x18] sm:$0xff]
        %v708 = vld [vmem:[%s4 + $0x20] sm:$0xff]
        %v709 = vld [vmem:[%s4 + $0x28] sm:$0xff]
        %v710 = vld [vmem:[%s4 + $0x30] sm:$0xff]
        %v711 = vld [vmem:[%s4 + $0x38] sm:$0xff]
        %v712 = vld [vmem:[%s4 + $0x40] sm:$0xff]
        %v713 = vld [vmem:[%s4 + $0x48] sm:$0xff]
        %v714 = vld [vmem:[%s4 + $0x50] sm:$0xff]
        %v715 = vld [vmem:[%s4 + $0x58] sm:$0xff]
        %v716 = vld [vmem:[%s4 + $0x60] sm:$0xff]
        %v717 = vld [vmem:[%s4 + $0x68] sm:$0xff]
        %v718 = vld [vmem:[%s4 + $0x70] sm:$0xff]
        %v719 = vld [vmem:[%s4 + $0x78] sm:$0xff]
        %728 = vst [vmem:[#allocation1] ss:$9 sm:$0xff] %v524
        %s729 = scalar_lea.vmem [#allocation1], 1
        %730 = vst [vmem:[%s729] ss:$9 sm:$0xff] %v525
        %s731 = scalar_lea.vmem [#allocation1], 2
        %732 = vst [vmem:[%s731] ss:$9 sm:$0xff] %v526
        %s733 = scalar_lea.vmem [#allocation1], 3
        %734 = vst [vmem:[%s733] ss:$9 sm:$0xff] %v527
        %s735 = scalar_lea.vmem [#allocation1], 4
        %736 = vst [vmem:[%s735] ss:$9 sm:$0xff] %v528
        %s737 = scalar_lea.vmem [#allocation1], 5
        %738 = vst [vmem:[%s737] ss:$9 sm:$0xff] %v529
        %s739 = scalar_lea.vmem [#allocation1], 6
        %740 = vst [vmem:[%s739] ss:$9 sm:$0xff] %v530
        %s741 = scalar_lea.vmem [#allocation1], 7
        %742 = vst [vmem:[%s741] ss:$9 sm:$0xff] %v531
        %v743 = vld [vmem:[#allocation1] sm:$0xff]
        %745 = vmatpush.msra.mxu0 %v719
        %746 = vmatpush.msra.mxu0 %v718
        %747 = vmatpush.msra.mxu0 %v717
        %748 = vmatpush.msra.mxu0 %v716
        %749 = vmatpush.msra.mxu0 %v715
        %750 = vmatpush.msra.mxu0 %v714
        %751 = vmatpush.msra.mxu0 %v713
        %752 = vmatpush.msra.mxu0 %v712
        %753 = vmatpush.msra.mxu0 %v711
        %754 = vmatpush.msra.mxu0 %v710
        %755 = vmatpush.msra.mxu0 %v709
        %756 = vmatpush.msra.mxu0 %v708
        %757 = vmatpush.msra.mxu0 %v707
        %758 = vmatpush.msra.mxu0 %v706
        %759 = vmatpush.msra.mxu0 %v705
        %760 = vmatpush.msra.mxu0 %v704
        %761 = vmatmul.f32.gmra.mxu0 %v743
        %v762 = vpop.f32.mrf.mxu0
        %v763 = vadd.f32 0.0, %v762
        %764 = vdwg.mxu0
        %v765 = vld [vmem:[%s6] sm:$0x1]
        %v767 = vperm.slane %v765, 0
        %v769 = vadd.f32 %v702, %v767
        %v770 = vmax.f32 %v769, 0.0
        %v771 = vand.u32 2147483647, %v769
        %v772 = vsub.f32 0.0, %v771
        %v773 = vmul.f32 %v772, 1.442695
        %v774 = vpow.pop %v773
        %v775 = vadd.f32 %v774, 1.0
        %v776 = vlog2.pop %v775
        %v777 = vmul.f32 %v776, 0.6931472
        %v778 = vmul.f32 -0.5, %v774
        %v779 = vadd.f32 %v778, 1.0
        %v780 = vmul.f32 %v779, %v774
        %v781 = vand.u32 2147483647, %v774
        %vm782 = vcmp.lt.f32.partialorder %v781, 0.0004427343
        %v783 = vsel %vm782, %v780, %v777
        %v784 = vadd.f32 %v770, %v783
        %v785 = vld [vmem:[%s7] sm:$0xff]
        %v786 = vld [vmem:[%s7 + $0x8] sm:$0xff]
        %v787 = vld [vmem:[%s7 + $0x10] sm:$0xff]
        %v788 = vld [vmem:[%s7 + $0x18] sm:$0xff]
        %v789 = vld [vmem:[%s7 + $0x20] sm:$0xff]
        %v790 = vld [vmem:[%s7 + $0x28] sm:$0xff]
        %v791 = vld [vmem:[%s7 + $0x30] sm:$0xff]
        %v792 = vld [vmem:[%s7 + $0x38] sm:$0xff]
        %v793 = vld [vmem:[%s8] sm:$0x1]
        %v795 = vperm.slane %v793, 0
        %vm797 = vcmask 523264
        %v799 = vsel %vm797, %v784, 0
        %801 = vmatpush.msra.mxu0 0.0
        %802 = vmatpush.msra.mxu0 0.0
        %803 = vmatpush.msra.mxu0 0.0
        %804 = vmatpush.msra.mxu0 0.0
        %805 = vmatpush.msra.mxu0 0.0
        %806 = vmatpush.msra.mxu0 0.0
        %807 = vmatpush.msra.mxu0 0.0
        %808 = vmatpush.msra.mxu0 0.0
        %809 = vmatpush.msra.mxu0 %v792
        %810 = vmatpush.msra.mxu0 %v791
        %811 = vmatpush.msra.mxu0 %v790
        %812 = vmatpush.msra.mxu0 %v789
        %813 = vmatpush.msra.mxu0 %v788
        %814 = vmatpush.msra.mxu0 %v787
        %815 = vmatpush.msra.mxu0 %v786
        %816 = vmatpush.msra.mxu0 %v785
        %817 = vmatmul.f32.gmra.mxu0 %v799
        %v818 = vpop.f32.mrf.mxu0
        %v819 = vadd.f32 %v795, %v818
        %820 = vdwg.mxu0
        %v821 = vmax.f32 %v819, 0.0
        %v822 = vand.u32 2147483647, %v819
        %v823 = vsub.f32 0.0, %v822
        %v824 = vmul.f32 %v823, 1.442695
        %v825 = vpow.pop %v824
        %v826 = vadd.f32 %v825, 1.0
        %v827 = vlog2.pop %v826
        %v828 = vmul.f32 %v827, 0.6931472
        %v829 = vmul.f32 -0.5, %v825
        %v830 = vadd.f32 %v829, 1.0
        %v831 = vmul.f32 %v830, %v825
        %v832 = vand.u32 2147483647, %v825
        %vm833 = vcmp.lt.f32.partialorder %v832, 0.0004427343
        %v834 = vsel %vm833, %v831, %v828
        %v835 = vadd.f32 %v821, %v834
        %v836 = vld [vmem:[%s9] sm:$0x1]
        %v838 = vperm.slane %v836, 0
        %v840 = vmul.f32 %v835, %v838
        %vm841 = vcmask 130048
        %v842 = vsel %vm841, %v840, 0.0
        %843 = vadd.xlane.f32.xlu0 %v842
        %v844 = vpop.xlane.xlu0 %843
        %v845 = vstv %s532
        %v846 = vadd.f32 %v844, %v845
        %v847 = vmax.f32 %v846, 0.0
        %v848 = vand.u32 2147483647, %v846
        %v849 = vsub.f32 0.0, %v848
        %v850 = vmul.f32 %v849, 1.442695
        %v851 = vpow.pop %v850
        %v852 = vadd.f32 %v851, 1.0
        %v853 = vlog2.pop %v852
        %v854 = vmul.f32 %v853, 0.6931472
        %v855 = vmul.f32 -0.5, %v851
        %v856 = vadd.f32 %v855, 1.0
        %v857 = vmul.f32 %v856, %v851
        %v858 = vand.u32 2147483647, %v851
        %vm859 = vcmp.lt.f32.partialorder %v858, 0.0004427343
        %v860 = vsel %vm859, %v857, %v854
        %v861 = vadd.f32 %v847, %v860
        %v862 = vmul.f32 %v524, %v524
        %v863 = vmul.f32 %v525, %v525
        %v864 = vmul.f32 %v526, %v526
        %v865 = vmul.f32 %v527, %v527
        %v866 = vmul.f32 %v528, %v528
        %v867 = vmul.f32 %v529, %v529
        %v868 = vmul.f32 %v530, %v530
        %v869 = vmul.f32 %v531, %v531
        %v870 = vld [vmem:[%s10] sm:$0x1]
        %v872 = vperm.slane %v870, 0
        %v874 = vrot.slane %v872, 1
        %v875 = vrot.slane %v872, 2
        %v876 = vrot.slane %v872, 3
        %v877 = vrot.slane %v872, 4
        %v878 = vrot.slane %v872, 5
        %v879 = vrot.slane %v872, 6
        %v880 = vrot.slane %v872, 7
        %v888 = vmul.f32 %v862, %v872
        %v889 = vmul.f32 %v863, %v874
        %v890 = vmul.f32 %v864, %v875
        %v891 = vmul.f32 %v865, %v876
        %v892 = vmul.f32 %v866, %v877
        %v893 = vmul.f32 %v867, %v878
        %v894 = vmul.f32 %v868, %v879
        %v895 = vmul.f32 %v869, %v880
        %904 = vst [vmem:[#allocation1] ss:$9 sm:$0xff] %v888
        %s905 = scalar_lea.vmem [#allocation1], 1
        %906 = vst [vmem:[%s905] ss:$9 sm:$0xff] %v889
        %s907 = scalar_lea.vmem [#allocation1], 2
        %908 = vst [vmem:[%s907] ss:$9 sm:$0xff] %v890
        %s909 = scalar_lea.vmem [#allocation1], 3
        %910 = vst [vmem:[%s909] ss:$9 sm:$0xff] %v891
        %s911 = scalar_lea.vmem [#allocation1], 4
        %912 = vst [vmem:[%s911] ss:$9 sm:$0xff] %v892
        %s913 = scalar_lea.vmem [#allocation1], 5
        %914 = vst [vmem:[%s913] ss:$9 sm:$0xff] %v893
        %s915 = scalar_lea.vmem [#allocation1], 6
        %916 = vst [vmem:[%s915] ss:$9 sm:$0xff] %v894
        %s917 = scalar_lea.vmem [#allocation1], 7
        %918 = vst [vmem:[%s917] ss:$9 sm:$0xff] %v895
        %v919 = vld [vmem:[#allocation1] sm:$0xff]
        %921 = vadd.xlane.f32.xlu0 %v919
        %v922 = vpop.xlane.xlu0 %921
        %v923 = vld [vmem:[%s11] sm:$0x1]
        %v925 = vperm.slane %v923, 0
        %v927 = vrot.slane %v925, 1
        %v928 = vrot.slane %v925, 2
        %v929 = vrot.slane %v925, 3
        %v930 = vrot.slane %v925, 4
        %v931 = vrot.slane %v925, 5
        %v932 = vrot.slane %v925, 6
        %v933 = vrot.slane %v925, 7
        %v941 = vmul.f32 %v862, %v925
        %v942 = vmul.f32 %v863, %v927
        %v943 = vmul.f32 %v864, %v928
        %v944 = vmul.f32 %v865, %v929
        %v945 = vmul.f32 %v866, %v930
        %v946 = vmul.f32 %v867, %v931
        %v947 = vmul.f32 %v868, %v932
        %v948 = vmul.f32 %v869, %v933
        %957 = vst [vmem:[#allocation1] ss:$9 sm:$0xff] %v941
        %s958 = scalar_lea.vmem [#allocation1], 1
        %959 = vst [vmem:[%s958] ss:$9 sm:$0xff] %v942
        %s960 = scalar_lea.vmem [#allocation1], 2
        %961 = vst [vmem:[%s960] ss:$9 sm:$0xff] %v943
        %s962 = scalar_lea.vmem [#allocation1], 3
        %963 = vst [vmem:[%s962] ss:$9 sm:$0xff] %v944
        %s964 = scalar_lea.vmem [#allocation1], 4
        %965 = vst [vmem:[%s964] ss:$9 sm:$0xff] %v945
        %s966 = scalar_lea.vmem [#allocation1], 5
        %967 = vst [vmem:[%s966] ss:$9 sm:$0xff] %v946
        %s968 = scalar_lea.vmem [#allocation1], 6
        %969 = vst [vmem:[%s968] ss:$9 sm:$0xff] %v947
        %s970 = scalar_lea.vmem [#allocation1], 7
        %971 = vst [vmem:[%s970] ss:$9 sm:$0xff] %v948
        %v972 = vld [vmem:[#allocation1] sm:$0xff]
        %974 = vadd.xlane.f32.xlu0 %v972
        %v975 = vpop.xlane.xlu0 %974
        %v976 = vadd.f32 %v975, 1e-30
        %v977 = vlog2.pop %v976
        %v978 = vmul.f32 %v977, 0.6931472
        %v979 = vadd.f32 %v922, 1e-30
        %v980 = vlog2.pop %v979
        %v981 = vmul.f32 %v980, 0.6931472
        %v982 = vsub.f32 %v978, %v981
        %v983 = vmul.f32 %v982, 0.6
        %v984 = vmul.f32 %v983, 1.442695
        %v985 = vpow.pop %v984
        %v986 = vstv %s534
        %v987 = vmul.f32 %v986, %v985
        %v988 = vld [vmem:[%s12] sm:$0x1]
        %v989 = vld [vmem:[%s13] sm:$0x1]
        %v991 = vperm.slane %v989, 0
        %v993 = vmul.f32 %v987, %v991
        %v995 = vperm.slane %v988, 0
        %v997 = vadd.f32 %v995, %v993
        %998 = vmax.xlane.f32.xlu0 %v997
        %v999 = vpop.xlane.xlu0 %998
        %v1000 = vstv %s533
        %v1001 = vrcp.pop %v999
        %v1002 = vmul.f32 %v999, %v1001
        %v1003 = vsub.f32 1.0, %v1002
        %v1004 = vmul.f32 %v1001, %v1003
        %v1005 = vadd.f32 %v1001, %v1004
        %vm1006 = vweird.f32 %v999
        %vm1007 = vweird.f32 %v1001
        %vm1008 = vmor %vm1006, %vm1007
        %v1009 = vsel %vm1008, %v1001, %v1005
        %v1010 = vand.u32 2147483647, %v999
        %vm1011 = vcmp.eq.f32.partialorder %v1010, 8.507059e+37
        %v1012 = vand.u32 %v999, 2147483648
        %v1013 = vor.u32 1.1754944e-38, %v1012
        %v1014 = vsel %vm1011, %v1013, %v1009
        %v1015 = vmul.f32 %v1000, %v1014
        %v1016 = vsub.f32 %v662, %v763
        %v1017 = vmul.f32 %v987, %v682
        %v1018 = vadd.f32 %v1016, %v1017
        %v1019 = vmul.f32 %v1015, %v1018
        %v1020 = vsub.f32 %v642, %v1019
        %v1021 = vmul.f32 %v1015, %v861
        %v1022 = vmul.f32 %v1021, 1e-06
        %v1023 = vsub.f32 0.5, %v1020
        %v1024 = vmul.f32 %v1023, 0.5
        %v1025 = vmul.f32 %v1024, 0.5
        %v1026 = vmul.f32 %v1022, 0.0
        %v1027 = vsub.f32 %v1025, %v1026
        %vm1028 = vcmp.lt.f32.partialorder %v1027, 0.0
        %v1029 = vsel %vm1028, 0.5, 0.0
        %v1030 = vsel %vm1028, 1.0, 0.5
        %v1031 = vadd.f32 %v1029, %v1030
        %v1032 = vmul.f32 %v1031, 0.5
        %v1033 = vsub.f32 %v1032, %v1020
        %v1034 = vmul.f32 %v1033, %v1032
        %v1035 = vsub.f32 1.0, %v1032
        %v1036 = vmul.f32 %v1034, %v1035
        %v1037 = vmul.f32 %v1032, 2.0
        %v1038 = vsub.f32 1.0, %v1037
        %v1039 = vmul.f32 %v1022, %v1038
        %v1040 = vsub.f32 %v1036, %v1039
        %vm1041 = vcmp.lt.f32.partialorder %v1040, 0.0
        %v1042 = vsel %vm1041, %v1032, %v1029
        %v1043 = vsel %vm1041, %v1030, %v1032
        %v1044 = vadd.f32 %v1042, %v1043
        %v1045 = vmul.f32 %v1044, 0.5
        %v1046 = vsub.f32 %v1045, %v1020
        %v1047 = vmul.f32 %v1046, %v1045
        %v1048 = vsub.f32 1.0, %v1045
        %v1049 = vmul.f32 %v1047, %v1048
        %v1050 = vmul.f32 %v1045, 2.0
        %v1051 = vsub.f32 1.0, %v1050
        %v1052 = vmul.f32 %v1022, %v1051
        %v1053 = vsub.f32 %v1049, %v1052
        %vm1054 = vcmp.lt.f32.partialorder %v1053, 0.0
        %v1055 = vsel %vm1054, %v1045, %v1042
        %v1056 = vsel %vm1054, %v1043, %v1045
        %v1057 = vadd.f32 %v1055, %v1056
        %v1058 = vmul.f32 %v1057, 0.5
        %v1059 = vsub.f32 %v1058, %v1020
        %v1060 = vmul.f32 %v1059, %v1058
        %v1061 = vsub.f32 1.0, %v1058
        %v1062 = vmul.f32 %v1060, %v1061
        %v1063 = vmul.f32 %v1058, 2.0
        %v1064 = vsub.f32 1.0, %v1063
        %v1065 = vmul.f32 %v1022, %v1064
        %v1066 = vsub.f32 %v1062, %v1065
        %vm1067 = vcmp.lt.f32.partialorder %v1066, 0.0
        %v1068 = vsel %vm1067, %v1058, %v1055
        %v1069 = vsel %vm1067, %v1056, %v1058
        %v1070 = vadd.f32 %v1068, %v1069
        %v1071 = vmul.f32 %v1070, 0.5
        %v1072 = vsub.f32 %v1071, %v1020
        %v1073 = vmul.f32 %v1072, %v1071
        %v1074 = vsub.f32 1.0, %v1071
        %v1075 = vmul.f32 %v1073, %v1074
        %v1076 = vmul.f32 %v1071, 2.0
        %v1077 = vsub.f32 1.0, %v1076
        %v1078 = vmul.f32 %v1022, %v1077
        %v1079 = vsub.f32 %v1075, %v1078
        %v1080 = vmul.f32 %v1071, -3.0
        %v1081 = vmul.f32 %v1080, %v1071
        %v1082 = vadd.f32 %v1020, 1.0
        %v1083 = vmul.f32 %v1082, 2.0
        %v1084 = vmul.f32 %v1083, %v1071
        %v1085 = vadd.f32 %v1081, %v1084
        %v1086 = vsub.f32 %v1085, %v1020
        %v1087 = vmul.f32 %v1022, 2.0
        %v1088 = vadd.f32 %v1086, %v1087
        %v1089 = vand.u32 2147483647, %v1088
        %vm1090 = vcmp.gt.f32.partialorder %v1089, 1e-12
        %v1091 = vsel %vm1090, %v1088, 1e-12
        %v1092 = vrcp.pop %v1091
        %v1093 = vmul.f32 %v1079, %v1092
        %v1094 = vsub.f32 %v1071, %v1093
        %v1095 = vmax.f32 %v1068, %v1094
        %v1096 = vmin.f32 %v1069, %v1095
        %v1097 = vsub.f32 %v1096, %v1020
        %v1098 = vmul.f32 %v1097, %v1096
        %v1099 = vsub.f32 1.0, %v1096
        %v1100 = vmul.f32 %v1098, %v1099
        %v1101 = vmul.f32 %v1096, 2.0
        %v1102 = vsub.f32 1.0, %v1101
        %v1103 = vmul.f32 %v1022, %v1102
        %v1104 = vsub.f32 %v1100, %v1103
        %v1105 = vmul.f32 %v1096, -3.0
        %v1106 = vmul.f32 %v1105, %v1096
        %v1107 = vmul.f32 %v1083, %v1096
        %v1108 = vadd.f32 %v1106, %v1107
        %v1109 = vsub.f32 %v1108, %v1020
        %v1110 = vadd.f32 %v1109, %v1087
        %v1111 = vand.u32 2147483647, %v1110
        %vm1112 = vcmp.gt.f32.partialorder %v1111, 1e-12
        %v1113 = vsel %vm1112, %v1110, 1e-12
        %v1114 = vrcp.pop %v1113
        %v1115 = vmul.f32 %v1104, %v1114
        %v1116 = vsub.f32 %v1096, %v1115
        %v1117 = vmax.f32 %v1068, %v1116
        %v1118 = vmin.f32 %v1069, %v1117
        %v1119 = vsub.f32 %v1118, %v1020
        %v1120 = vmul.f32 %v1119, %v1118
        %v1121 = vsub.f32 1.0, %v1118
        %v1122 = vmul.f32 %v1120, %v1121
        %v1123 = vmul.f32 %v1118, 2.0
        %v1124 = vsub.f32 1.0, %v1123
        %v1125 = vmul.f32 %v1022, %v1124
        %v1126 = vsub.f32 %v1122, %v1125
        %v1127 = vmul.f32 %v1118, -3.0
        %v1128 = vmul.f32 %v1127, %v1118
        %v1129 = vmul.f32 %v1083, %v1118
        %v1130 = vadd.f32 %v1128, %v1129
        %v1131 = vsub.f32 %v1130, %v1020
        %v1132 = vadd.f32 %v1131, %v1087
        %v1133 = vand.u32 2147483647, %v1132
        %vm1134 = vcmp.gt.f32.partialorder %v1133, 1e-12
        %v1135 = vsel %vm1134, %v1132, 1e-12
        %v1136 = vrcp.pop %v1135
        %v1137 = vmul.f32 %v1126, %v1136
        %v1138 = vsub.f32 %v1118, %v1137
        %v1139 = vmax.f32 %v1068, %v1138
        %v1140 = vmin.f32 %v1069, %v1139
        %v1141 = vld [vmem:[%s5] sm:$0xff]
        %v1142 = vld [vmem:[%s5 + $0x8] sm:$0xff]
        %v1143 = vld [vmem:[%s5 + $0x10] sm:$0xff]
        %v1144 = vld [vmem:[%s5 + $0x18] sm:$0xff]
        %vm1145 = vcmask 261120
        %v1147 = vsel %vm1145, %v1140, 0
        %1149 = vmatpush.msra.mxu0 0.0
        %1150 = vmatpush.msra.mxu0 0.0
        %1151 = vmatpush.msra.mxu0 0.0
        %1152 = vmatpush.msra.mxu0 0.0
        %1153 = vmatpush.msra.mxu0 0.0
        %1154 = vmatpush.msra.mxu0 0.0
        %1155 = vmatpush.msra.mxu0 0.0
        %1156 = vmatpush.msra.mxu0 0.0
        %1157 = vmatpush.msra.mxu0 0.0
        %1158 = vmatpush.msra.mxu0 0.0
        %1159 = vmatpush.msra.mxu0 0.0
        %1160 = vmatpush.msra.mxu0 0.0
        %1161 = vmatpush.msra.mxu0 %v1144
        %1162 = vmatpush.msra.mxu0 %v1143
        %1163 = vmatpush.msra.mxu0 %v1142
        %1164 = vmatpush.msra.mxu0 %v1141
        %1165 = vmatmul.f32.gmra.mxu0 %v1147
        %v1166 = vpop.f32.mrf.mxu0
        %v1167 = vadd.f32 0.0, %v1166
        %1168 = vdwg.mxu0
        %v1170 = vrot.slane %v1167, 1
        %v1171 = vrot.slane %v1167, 2
        %v1172 = vrot.slane %v1167, 3
        %v1173 = vrot.slane %v1167, 4
        %v1174 = vrot.slane %v1167, 5
        %v1175 = vrot.slane %v1167, 6
        %v1176 = vrot.slane %v1167, 7
        %1184 = vst [vmem:[%s504] sm:$0x1] %v1167
        %1185 = vst [vmem:[%s504 + $0x1] sm:$0x1] %v1170
        %1186 = vst [vmem:[%s504 + $0x2] sm:$0x1] %v1171
        %1187 = vst [vmem:[%s504 + $0x3] sm:$0x1] %v1172
        %1188 = vst [vmem:[%s504 + $0x4] sm:$0x1] %v1173
        %1189 = vst [vmem:[%s504 + $0x5] sm:$0x1] %v1174
        %1190 = vst [vmem:[%s504 + $0x6] sm:$0x1] %v1175
        %1191 = vst [vmem:[%s504 + $0x7] sm:$0x1] %v1176
        %s1192 = sand.u32 %s342, 1
        %s1193 = scalar_lea.sflag [#allocation4], %s1192
        %s1194 = sand.u32 %s342, 1
        %s1195 = smul.addr %s1194, 8
        %s1196 = scalar_lea.vmem [#allocation7], %s1195
        // Predicated region
        $region85: #{tpu_custom_call.1} parent=75 // pred_check
          %p1197 = pneg %p352
        $region86: #{tpu_custom_call.1} parent=75 // pred_check_branch
          %1199 = sbr.rel (%p1197) target = $region88
        $region87: #{tpu_custom_call.1} parent=75 // pred_region
          %s1200 = smul.u32 8, %s30
          %1202 = vsyncadd %s1193, 0
          %s1203 = scalar_lea.hbm %s14, %s1200
          %s1204 = sshll.u32 %s1196, 4
          %s1205 = int_to_ptr.vmem [resolvable:$true] %s1204
          %s1206 = sshll.u32 %s1203, 4
          %s1207 = int_to_ptr.hbm [resolvable:$true] %s1206
          %1212 = dma.vmem_to_hbm [thread:$0]  %s1205, 128, %s1207, %s1193, 16, 16, 1
        $region88: #{tpu_custom_call.1} parent=75 // pred_fallthru
          _
      $region76: #{tpu_custom_call.1} parent=5 // pred_fallthru
        _
      %p1213 = scmp.le.s32.totalorder 2, %s25
      // Predicated region
      $region89: #{tpu_custom_call.1} parent=5 // pred_check
        %p1214 = pneg %p1213
      $region90: #{tpu_custom_call.1} parent=5 // pred_check_branch
        %1216 = sbr.rel (%p1214) target = $region92
      $region91: #{tpu_custom_call.1} parent=5 // pred_region
        %s1217 = ssub.s32 %s25, 2
        // Predicated region
        $region93: #{tpu_custom_call.1} parent=91 // pred_check
          %p1218 = pneg %p358
        $region94: #{tpu_custom_call.1} parent=91 // pred_check_branch
          %1220 = sbr.rel (%p1218) target = $region96
        $region95: #{tpu_custom_call.1} parent=91 // pred_region
          %s1221 = sand.u32 %s343, 1
          %s1222 = scalar_lea.sflag [#allocation4], %s1221
          %s1223 = sand.u32 %s343, 1
          %s1224 = smul.addr %s1223, 8
          %s1225 = scalar_lea.vmem [#allocation7], %s1224
          %1227 = dma.done %s1222, 128
        $region96: #{tpu_custom_call.1} parent=91 // pred_fallthru
          _
      $region92: #{tpu_custom_call.1} parent=5 // pred_fallthru
        _
    $region6: #{tpu_custom_call.1} parent=1 // loop_footer
      %s29 = sadd.s32 1, %s25
    $region7: #{tpu_custom_call.1} parent=1 // loop_footer_branch
      %24 = sbr.rel target = $region3
    $region8: #{tpu_custom_call.1} parent=1 // loop_exit
      _
    %1228 = vsyncpa [#allocation3], 1
    %s1229 = scalar_lea.sflag [#allocation3], 1
    %1230 = vsyncpa %s1229, 1
    %1231 = vsyncpa [#allocation4], 1
    %s1232 = scalar_lea.sflag [#allocation4], 1
    %1233 = vsyncpa %s1232, 1
    %1234 = vsyncpa [#allocation5], 1
    %s1235 = scalar_lea.sflag [#allocation5], 1
    %1236 = vsyncpa %s1235, 1

</llo_original>
